<compile_context>
chip_gen: v7x
topology: tpu7x:2x2x1
jax: 0.10.0
libtpu: 0.0.40
codegen_flags: <defaults>
</compile_context>

<pallas_src>
import math

import jax
import jax.numpy as jnp
from jax.experimental import pallas as pl
from jax.experimental.pallas import tpu as pltpu

LANE = 128


def _round_up(v, m):
    return (v + m - 1) // m * m


def _gru_unit_kernel(x_ref, a_ref, s_ref, wa_ref, ws_ref, wxzr_ref, wh1_ref,
                     b_ref, o_ref):
    """One (TM, D) row-tile of the fused GRU update."""
    TM = x_ref.shape[0]
    D = o_ref.shape[1]           # true feature width
    Dp = wh1_ref.shape[1]        # 128-lane padded gate width (Dp == D if aligned)
    mm_dtype = wa_ref.dtype      # bf16 (fast path) or f32 (exact path)

    wa = wa_ref[...]             # (D, 3*Dp)  [Wz0 | Wr0 | Wh0]^T
    ws = ws_ref[...]             # (D, 3*Dp)  [Wz2 | Wr2 | Wh2]^T
    wxzr = wxzr_ref[...]         # (D, 2*Dp)  [Wz1 | Wr1]^T
    wh1 = wh1_ref[...]           # (D, Dp)    Wh1^T
    b = b_ref[...]               # (1, 3*Dp)  per-gate summed biases (f32)

    # Two independent half-tiles in one basic block: the scheduler overlaps one
    # half's sigmoid/tanh (EUP) with the other half's matmuls (MXU).
    n_stages = 2 if (TM >= 16 and TM % 16 == 0) else 1
    rows = TM // n_stages

    for st in range(n_stages):
        sl = pl.ds(st * rows, rows)
        Xf = x_ref[sl, :].astype(jnp.float32)                     # (rows, D)
        Xm = x_ref[sl, :].astype(mm_dtype)
        Am = a_ref[sl, :].astype(mm_dtype)
        Sm = s_ref[sl, :].astype(mm_dtype)

        # Fused z|r|h pre-activations from `a` and `s` (+ summed biases).
        acc = (jnp.dot(Am, wa, preferred_element_type=jnp.float32)
               + jnp.dot(Sm, ws, preferred_element_type=jnp.float32)
               + b)                                               # (rows, 3*Dp)
        # Fused z|r pre-activations from `x` (h's x-term needs r first).
        zr = jnp.dot(Xm, wxzr, preferred_element_type=jnp.float32)  # (rows, 2*Dp)

        z = jax.nn.sigmoid(acc[:, :Dp] + zr[:, :Dp])              # (rows, Dp)
        r = jax.nn.sigmoid(acc[:, Dp:2 * Dp] + zr[:, Dp:])        # (rows, Dp)

        xr = (Xf * r[:, :D]).astype(mm_dtype)                     # (rows, D)
        pre_h = acc[:, 2 * Dp:] + jnp.dot(xr, wh1,
                                          preferred_element_type=jnp.float32)
        h = jnp.tanh(pre_h)                                       # act == tanh

        z_d = z[:, :D]                                            # offset-0 slice
        out = h[:, :D] * z_d + Xf * (1.0 - z_d)
        o_ref[sl, :] = out.astype(o_ref.dtype)


def pack_params(params, *, matmul_dtype=jnp.bfloat16):
    """One-time weight prep (outside the forward): transpose + 128-lane pad +
    per-gate concat + bias sum.  Weights are stored in `matmul_dtype`."""
    D = params["lin_z0_w"].shape[0]
    Dp = _round_up(D, LANE)

    def wblock(*names):
        cols = []
        for n in names:
            wt = params[n + "_w"].T                     # (in, out) = (D, D)
            if Dp != D:
                wt = jnp.pad(wt, ((0, 0), (0, Dp - D)))
            cols.append(wt)
        return jnp.concatenate(cols, axis=1).astype(matmul_dtype)

    def bblock(*names):
        bsum = sum(params[n + "_b"] for n in names)
        if Dp != D:
            bsum = jnp.pad(bsum, (0, Dp - D))
        return bsum

    wa = wblock("lin_z0", "lin_r0", "lin_h0")           # (D, 3*Dp)
    ws = wblock("lin_z2", "lin_r2", "lin_h2")           # (D, 3*Dp)
    wxzr = wblock("lin_z1", "lin_r1")                   # (D, 2*Dp)
    wh1 = wblock("lin_h1")                              # (D, Dp)
    b = jnp.concatenate([bblock("lin_z0", "lin_z1", "lin_z2"),
                         bblock("lin_r0", "lin_r1", "lin_r2"),
                         bblock("lin_h0", "lin_h1", "lin_h2")]
                        )[None, :].astype(jnp.float32)  # (1, 3*Dp), stays f32
    return {"wa": wa, "ws": ws, "wxzr": wxzr, "wh1": wh1, "b": b,
            "dim": D, "padded_dim": Dp}


def _vmem_budget_bytes(TM, D, Dp, io_itemsize, mm_itemsize):
    """Explicit VMEM budget: weights (x2 buffers, conservative) + double-
    buffered x/a/s/out tiles + live f32 temporaries, with generous headroom."""
    weight_bytes = (3 * Dp + 3 * Dp + 2 * Dp + Dp) * D * mm_itemsize + 3 * Dp * 4
    io_bytes = 2 * 4 * TM * D * io_itemsize     # double-buffered x/a/s/out tiles
    temp_bytes = 12 * TM * Dp * 4               # acc/zr/z/r/h f32 slabs
    budget = 2 * weight_bytes + io_bytes + temp_bytes
    return int(min(max(2 * budget + (4 << 20), 16 << 20), 64 << 20))


def gru_unit_forward(x, a, s, packed, *, block_rows=256):
    """x, a, s: (..., D). Returns same shape/dtype as x."""
    lead = x.shape[:-1]
    D = packed["dim"]
    Dp = packed["padded_dim"]
    assert x.shape[-1] == D and a.shape == x.shape and s.shape == x.shape
    M = int(math.prod(lead)) if lead else 1

    x2 = x.reshape(M, D)
    a2 = a.reshape(M, D)
    s2 = s.reshape(M, D)

    # Row tile: multiple of 8 sublanes; tiny inputs collapse to one grid step.
    TM = _round_up(min(block_rows, M), 8)
    Mp = _round_up(M, TM)
    if Mp != M:                                  # pad only on ragged remainder
        pad = ((0, Mp - M), (0, 0))
        x2, a2, s2 = (jnp.pad(v, pad) for v in (x2, a2, s2))
    grid = (Mp // TM,)

    vmem_limit = _vmem_budget_bytes(
        TM, D, Dp, x.dtype.itemsize, packed["wa"].dtype.itemsize)

    def run(single_buffer_weights):
        if single_buffer_weights:
            # Grid-invariant blocks: a single VMEM buffer is enough (saves the
            # default double buffer -- matters on v7x's 64 MiB VMEM).
            wspec = lambda shape: pl.BlockSpec(shape, lambda i: (0, 0),
                                               pipeline_mode=pl.Buffered(1))
        else:
            wspec = lambda shape: pl.BlockSpec(shape, lambda i: (0, 0))
        return pl.pallas_call(
            _gru_unit_kernel,
            out_shape=jax.ShapeDtypeStruct((Mp, D), x.dtype),
            grid_spec=pltpu.PrefetchScalarGridSpec(
                num_scalar_prefetch=0,
                grid=grid,
                in_specs=[
                    pl.BlockSpec((TM, D), lambda i: (i, 0)),      # x
                    pl.BlockSpec((TM, D), lambda i: (i, 0)),      # a
                    pl.BlockSpec((TM, D), lambda i: (i, 0)),      # s
                    wspec((D, 3 * Dp)),                           # [Wz0|Wr0|Wh0]^T
                    wspec((D, 3 * Dp)),                           # [Wz2|Wr2|Wh2]^T
                    wspec((D, 2 * Dp)),                           # [Wz1|Wr1]^T
                    wspec((D, Dp)),                               # Wh1^T
                    wspec((1, 3 * Dp)),                           # summed biases
                ],
                out_specs=pl.BlockSpec((TM, D), lambda i: (i, 0)),
            ),
            compiler_params=pltpu.CompilerParams(
                dimension_semantics=("parallel",),
                vmem_limit_bytes=vmem_limit,
            ),
        )(x2, a2, s2, packed["wa"], packed["ws"], packed["wxzr"],
          packed["wh1"], packed["b"])

    try:
        out = run(True)
    except Exception:
        # Fallback if pl.Buffered(1) is rejected on this JAX build: default
        # double-buffered weight blocks (numerically identical).
        out = run(False)

    if Mp != M:
        out = out[:M]
    return out.reshape(*lead, D)


def _xavier_uniform(key, out_dim, in_dim, dtype=jnp.float32):
    bound = math.sqrt(6.0 / (in_dim + out_dim))
    return jax.random.uniform(key, (out_dim, in_dim), dtype, -bound, bound)


def init_params(key, hid_dim):
    names = ["lin_z0", "lin_z1", "lin_z2",
             "lin_r0", "lin_r1", "lin_r2",
             "lin_h0", "lin_h1", "lin_h2"]
    keys = jax.random.split(key, 2 * len(names))
    params = {}
    for i, n in enumerate(names):
        # PyTorch nn.Linear stores weight as (out_features, in_features).
        params[n + "_w"] = _xavier_uniform(keys[2 * i], hid_dim, hid_dim)
        # The module zeros biases; small random biases exercise the bias path.
        params[n + "_b"] = 0.1 * jax.random.normal(keys[2 * i + 1], (hid_dim,),
                                                   jnp.float32)
    return params


def gru_unit_reference(x, a, s, params, act=jnp.tanh):
    """Pure-JAX f32 reference matching the PyTorch forward."""
    def lin(name, v):
        return v @ params[name + "_w"].T + params[name + "_b"]
    z = jax.nn.sigmoid(lin("lin_z0", a) + lin("lin_z1", x) + lin("lin_z2", s))
    r = jax.nn.sigmoid(lin("lin_r0", a) + lin("lin_r1", x) + lin("lin_r2", s))
    h = act(lin("lin_h0", a) + lin("lin_h1", x * r) + lin("lin_h2", s))
    return h * z + x * (1.0 - z)


if __name__ == "__main__":
    B, N, D = 2, 8, 32   # batch, nodes/seq, hid_dim

    key = jax.random.PRNGKey(0)
    kx, ka, ks, kp = jax.random.split(key, 4)
    x = jax.random.normal(kx, (B, N, D), jnp.float32)
    a = jax.random.normal(ka, (B, N, D), jnp.float32)
    s = jax.random.normal(ks, (B, N, D), jnp.float32)

    params = init_params(kp, D)
    ref = gru_unit_reference(x, a, s, params)

    # 1) Exact-precision path (f32 weights): tight check of kernel structure.
    packed_f32 = pack_params(params, matmul_dtype=jnp.float32)
    out_f32 = jax.block_until_ready(gru_unit_forward(x, a, s, packed_f32))
    assert out_f32.shape == (B, N, D)
    err_f32 = float(jnp.max(jnp.abs(out_f32 - ref)))
    assert jnp.allclose(out_f32, ref, atol=2e-5, rtol=2e-5), err_f32

    # 2) bf16-MXU fast path (production config): looser tolerance for the
    #    bf16 matmul-operand rounding; gate math stays f32.
    packed_bf16 = pack_params(params, matmul_dtype=jnp.bfloat16)
    out_bf16 = jax.block_until_ready(gru_unit_forward(x, a, s, packed_bf16))
    assert out_bf16.shape == (B, N, D)
    err_bf16 = float(jnp.max(jnp.abs(out_bf16 - ref)))
    assert jnp.allclose(out_bf16, ref, atol=5e-2, rtol=5e-2), err_bf16

    print("KERNEL_OK")
</pallas_src>

<mosaic_0001>
module attributes {stable_mosaic.version = 11 : i64} {
  func.func @_gru_unit_kernel(%arg0: i32, %arg1: memref<16x32xf32, #tpu.memory_space<vmem>>, %arg2: memref<16x32xf32, #tpu.memory_space<vmem>>, %arg3: memref<16x32xf32, #tpu.memory_space<vmem>>, %arg4: memref<32x384xf32, #tpu.memory_space<vmem>>, %arg5: memref<32x384xf32, #tpu.memory_space<vmem>>, %arg6: memref<32x256xf32, #tpu.memory_space<vmem>>, %arg7: memref<32x128xf32, #tpu.memory_space<vmem>>, %arg8: memref<1x384xf32, #tpu.memory_space<vmem>>, %arg9: memref<16x32xf32, #tpu.memory_space<vmem>>) attributes {dimension_semantics = [#tpu.dimension_semantics<parallel>], iteration_bounds = array<i64: 1>, scalar_prefetch = 0 : i64, scratch_operands = 0 : i64, tpu.core_type = #tpu.core_type<tc>, window_params = [{transform_indices = @transform_0, window_bounds = array<i64: 16, 32>}, {transform_indices = @transform_1, window_bounds = array<i64: 16, 32>}, {transform_indices = @transform_2, window_bounds = array<i64: 16, 32>}, {pipeline_mode = #tpu.pipeline_mode<synchronous>, transform_indices = @transform_3, window_bounds = array<i64: 32, 384>}, {pipeline_mode = #tpu.pipeline_mode<synchronous>, transform_indices = @transform_4, window_bounds = array<i64: 32, 384>}, {pipeline_mode = #tpu.pipeline_mode<synchronous>, transform_indices = @transform_5, window_bounds = array<i64: 32, 256>}, {pipeline_mode = #tpu.pipeline_mode<synchronous>, transform_indices = @transform_6, window_bounds = array<i64: 32, 128>}, {pipeline_mode = #tpu.pipeline_mode<synchronous>, transform_indices = @transform_7, window_bounds = array<i64: 1, 384>}, {transform_indices = @transform_8, window_bounds = array<i64: 16, 32>}]} {
    %c0 = arith.constant 0 : index
    %c0_0 = arith.constant 0 : index
    %0 = vector.load %arg4[%c0, %c0_0] : memref<32x384xf32, #tpu.memory_space<vmem>>, vector<32x384xf32>
    %c0_1 = arith.constant 0 : index
    %c0_2 = arith.constant 0 : index
    %1 = vector.load %arg5[%c0_1, %c0_2] : memref<32x384xf32, #tpu.memory_space<vmem>>, vector<32x384xf32>
    %c0_3 = arith.constant 0 : index
    %c0_4 = arith.constant 0 : index
    %2 = vector.load %arg6[%c0_3, %c0_4] : memref<32x256xf32, #tpu.memory_space<vmem>>, vector<32x256xf32>
    %c0_5 = arith.constant 0 : index
    %c0_6 = arith.constant 0 : index
    %3 = vector.load %arg7[%c0_5, %c0_6] : memref<32x128xf32, #tpu.memory_space<vmem>>, vector<32x128xf32>
    %c0_7 = arith.constant 0 : index
    %c0_8 = arith.constant 0 : index
    %4 = vector.load %arg8[%c0_7, %c0_8] : memref<1x384xf32, #tpu.memory_space<vmem>>, vector<1x384xf32>
    %c0_9 = arith.constant 0 : index
    %c0_10 = arith.constant 0 : index
    %5 = vector.load %arg1[%c0_9, %c0_10] : memref<16x32xf32, #tpu.memory_space<vmem>>, vector<8x32xf32>
    %c0_11 = arith.constant 0 : index
    %c0_12 = arith.constant 0 : index
    %6 = vector.load %arg1[%c0_11, %c0_12] : memref<16x32xf32, #tpu.memory_space<vmem>>, vector<8x32xf32>
    %c0_13 = arith.constant 0 : index
    %c0_14 = arith.constant 0 : index
    %7 = vector.load %arg2[%c0_13, %c0_14] : memref<16x32xf32, #tpu.memory_space<vmem>>, vector<8x32xf32>
    %c0_15 = arith.constant 0 : index
    %c0_16 = arith.constant 0 : index
    %8 = vector.load %arg3[%c0_15, %c0_16] : memref<16x32xf32, #tpu.memory_space<vmem>>, vector<8x32xf32>
    %cst = arith.constant dense<0.000000e+00> : vector<8x384xf32>
    %9 = tpu.matmul %7, %0, %cst {dimension_numbers = #tpu.dot_dimension_numbers<[1], [0], [0], [1], [0, 0, 1, 1], [], []>} : vector<8x32xf32>, vector<32x384xf32>, vector<8x384xf32> -> vector<8x384xf32>
    %cst_17 = arith.constant dense<0.000000e+00> : vector<8x384xf32>
    %10 = tpu.matmul %8, %1, %cst_17 {dimension_numbers = #tpu.dot_dimension_numbers<[1], [0], [0], [1], [0, 0, 1, 1], [], []>} : vector<8x32xf32>, vector<32x384xf32>, vector<8x384xf32> -> vector<8x384xf32>
    %11 = arith.addf %9, %10 : vector<8x384xf32>
    %12 = vector.broadcast %4 : vector<1x384xf32> to vector<8x384xf32>
    %13 = arith.addf %11, %12 : vector<8x384xf32>
    %cst_18 = arith.constant dense<0.000000e+00> : vector<8x256xf32>
    %14 = tpu.matmul %6, %2, %cst_18 {dimension_numbers = #tpu.dot_dimension_numbers<[1], [0], [0], [1], [0, 0, 1, 1], [], []>} : vector<8x32xf32>, vector<32x256xf32>, vector<8x256xf32> -> vector<8x256xf32>
    %15 = vector.extract_strided_slice %13 {offsets = [0, 0], sizes = [8, 128], strides = [1, 1]} : vector<8x384xf32> to vector<8x128xf32>
    %16 = vector.extract_strided_slice %14 {offsets = [0, 0], sizes = [8, 128], strides = [1, 1]} : vector<8x256xf32> to vector<8x128xf32>
    %17 = arith.addf %15, %16 : vector<8x128xf32>
    %18 = arith.negf %17 : vector<8x128xf32>
    %19 = math.exp %18 : vector<8x128xf32>
    %cst_19 = arith.constant 1.000000e+00 : f32
    %20 = vector.broadcast %cst_19 : f32 to vector<8x128xf32>
    %21 = arith.addf %20, %19 : vector<8x128xf32>
    %22 = arith.divf %20, %21 : vector<8x128xf32>
    %23 = vector.extract_strided_slice %13 {offsets = [0, 128], sizes = [8, 128], strides = [1, 1]} : vector<8x384xf32> to vector<8x128xf32>
    %24 = vector.extract_strided_slice %14 {offsets = [0, 128], sizes = [8, 128], strides = [1, 1]} : vector<8x256xf32> to vector<8x128xf32>
    %25 = arith.addf %23, %24 : vector<8x128xf32>
    %26 = arith.negf %25 : vector<8x128xf32>
    %27 = math.exp %26 : vector<8x128xf32>
    %cst_20 = arith.constant 1.000000e+00 : f32
    %28 = vector.broadcast %cst_20 : f32 to vector<8x128xf32>
    %29 = arith.addf %28, %27 : vector<8x128xf32>
    %30 = arith.divf %28, %29 : vector<8x128xf32>
    %31 = vector.extract_strided_slice %30 {offsets = [0, 0], sizes = [8, 32], strides = [1, 1]} : vector<8x128xf32> to vector<8x32xf32>
    %32 = arith.mulf %5, %31 : vector<8x32xf32>
    %33 = vector.extract_strided_slice %13 {offsets = [0, 256], sizes = [8, 128], strides = [1, 1]} : vector<8x384xf32> to vector<8x128xf32>
    %cst_21 = arith.constant dense<0.000000e+00> : vector<8x128xf32>
    %34 = tpu.matmul %32, %3, %cst_21 {dimension_numbers = #tpu.dot_dimension_numbers<[1], [0], [0], [1], [0, 0, 1, 1], [], []>} : vector<8x32xf32>, vector<32x128xf32>, vector<8x128xf32> -> vector<8x128xf32>
    %35 = arith.addf %33, %34 : vector<8x128xf32>
    %36 = math.tanh %35 : vector<8x128xf32>
    %37 = vector.extract_strided_slice %22 {offsets = [0, 0], sizes = [8, 32], strides = [1, 1]} : vector<8x128xf32> to vector<8x32xf32>
    %38 = vector.extract_strided_slice %36 {offsets = [0, 0], sizes = [8, 32], strides = [1, 1]} : vector<8x128xf32> to vector<8x32xf32>
    %39 = arith.mulf %38, %37 : vector<8x32xf32>
    %cst_22 = arith.constant 1.000000e+00 : f32
    %40 = vector.broadcast %cst_22 : f32 to vector<8x32xf32>
    %41 = arith.subf %40, %37 : vector<8x32xf32>
    %42 = arith.mulf %5, %41 : vector<8x32xf32>
    %43 = arith.addf %39, %42 : vector<8x32xf32>
    %c0_23 = arith.constant 0 : index
    %c0_24 = arith.constant 0 : index
    %44 = vector.load %arg9[%c0_23, %c0_24] : memref<16x32xf32, #tpu.memory_space<vmem>>, vector<8x32xf32>
    tpu.vector_store %arg9[%c0_23, %c0_24], %43 {strides = array<i32>} : memref<16x32xf32, #tpu.memory_space<vmem>>, vector<8x32xf32>,
    %c8 = arith.constant 8 : index
    %c0_25 = arith.constant 0 : index
    %45 = vector.load %arg1[%c8, %c0_25] : memref<16x32xf32, #tpu.memory_space<vmem>>, vector<8x32xf32>
    %c8_26 = arith.constant 8 : index
    %c0_27 = arith.constant 0 : index
    %46 = vector.load %arg1[%c8_26, %c0_27] : memref<16x32xf32, #tpu.memory_space<vmem>>, vector<8x32xf32>
    %c8_28 = arith.constant 8 : index
    %c0_29 = arith.constant 0 : index
    %47 = vector.load %arg2[%c8_28, %c0_29] : memref<16x32xf32, #tpu.memory_space<vmem>>, vector<8x32xf32>
    %c8_30 = arith.constant 8 : index
    %c0_31 = arith.constant 0 : index
    %48 = vector.load %arg3[%c8_30, %c0_31] : memref<16x32xf32, #tpu.memory_space<vmem>>, vector<8x32xf32>
    %cst_32 = arith.constant dense<0.000000e+00> : vector<8x384xf32>
    %49 = tpu.matmul %47, %0, %cst_32 {dimension_numbers = #tpu.dot_dimension_numbers<[1], [0], [0], [1], [0, 0, 1, 1], [], []>} : vector<8x32xf32>, vector<32x384xf32>, vector<8x384xf32> -> vector<8x384xf32>
    %cst_33 = arith.constant dense<0.000000e+00> : vector<8x384xf32>
    %50 = tpu.matmul %48, %1, %cst_33 {dimension_numbers = #tpu.dot_dimension_numbers<[1], [0], [0], [1], [0, 0, 1, 1], [], []>} : vector<8x32xf32>, vector<32x384xf32>, vector<8x384xf32> -> vector<8x384xf32>
    %51 = arith.addf %49, %50 : vector<8x384xf32>
    %52 = vector.broadcast %4 : vector<1x384xf32> to vector<8x384xf32>
    %53 = arith.addf %51, %52 : vector<8x384xf32>
    %cst_34 = arith.constant dense<0.000000e+00> : vector<8x256xf32>
    %54 = tpu.matmul %46, %2, %cst_34 {dimension_numbers = #tpu.dot_dimension_numbers<[1], [0], [0], [1], [0, 0, 1, 1], [], []>} : vector<8x32xf32>, vector<32x256xf32>, vector<8x256xf32> -> vector<8x256xf32>
    %55 = vector.extract_strided_slice %53 {offsets = [0, 0], sizes = [8, 128], strides = [1, 1]} : vector<8x384xf32> to vector<8x128xf32>
    %56 = vector.extract_strided_slice %54 {offsets = [0, 0], sizes = [8, 128], strides = [1, 1]} : vector<8x256xf32> to vector<8x128xf32>
    %57 = arith.addf %55, %56 : vector<8x128xf32>
    %58 = arith.negf %57 : vector<8x128xf32>
    %59 = math.exp %58 : vector<8x128xf32>
    %cst_35 = arith.constant 1.000000e+00 : f32
    %60 = vector.broadcast %cst_35 : f32 to vector<8x128xf32>
    %61 = arith.addf %60, %59 : vector<8x128xf32>
    %62 = arith.divf %60, %61 : vector<8x128xf32>
    %63 = vector.extract_strided_slice %53 {offsets = [0, 128], sizes = [8, 128], strides = [1, 1]} : vector<8x384xf32> to vector<8x128xf32>
    %64 = vector.extract_strided_slice %54 {offsets = [0, 128], sizes = [8, 128], strides = [1, 1]} : vector<8x256xf32> to vector<8x128xf32>
    %65 = arith.addf %63, %64 : vector<8x128xf32>
    %66 = arith.negf %65 : vector<8x128xf32>
    %67 = math.exp %66 : vector<8x128xf32>
    %cst_36 = arith.constant 1.000000e+00 : f32
    %68 = vector.broadcast %cst_36 : f32 to vector<8x128xf32>
    %69 = arith.addf %68, %67 : vector<8x128xf32>
    %70 = arith.divf %68, %69 : vector<8x128xf32>
    %71 = vector.extract_strided_slice %70 {offsets = [0, 0], sizes = [8, 32], strides = [1, 1]} : vector<8x128xf32> to vector<8x32xf32>
    %72 = arith.mulf %45, %71 : vector<8x32xf32>
    %73 = vector.extract_strided_slice %53 {offsets = [0, 256], sizes = [8, 128], strides = [1, 1]} : vector<8x384xf32> to vector<8x128xf32>
    %cst_37 = arith.constant dense<0.000000e+00> : vector<8x128xf32>
    %74 = tpu.matmul %72, %3, %cst_37 {dimension_numbers = #tpu.dot_dimension_numbers<[1], [0], [0], [1], [0, 0, 1, 1], [], []>} : vector<8x32xf32>, vector<32x128xf32>, vector<8x128xf32> -> vector<8x128xf32>
    %75 = arith.addf %73, %74 : vector<8x128xf32>
    %76 = math.tanh %75 : vector<8x128xf32>
    %77 = vector.extract_strided_slice %62 {offsets = [0, 0], sizes = [8, 32], strides = [1, 1]} : vector<8x128xf32> to vector<8x32xf32>
    %78 = vector.extract_strided_slice %76 {offsets = [0, 0], sizes = [8, 32], strides = [1, 1]} : vector<8x128xf32> to vector<8x32xf32>
    %79 = arith.mulf %78, %77 : vector<8x32xf32>
    %cst_38 = arith.constant 1.000000e+00 : f32
    %80 = vector.broadcast %cst_38 : f32 to vector<8x32xf32>
    %81 = arith.subf %80, %77 : vector<8x32xf32>
    %82 = arith.mulf %45, %81 : vector<8x32xf32>
    %83 = arith.addf %79, %82 : vector<8x32xf32>
    %c8_39 = arith.constant 8 : index
    %c0_40 = arith.constant 0 : index
    %84 = vector.load %arg9[%c8_39, %c0_40] : memref<16x32xf32, #tpu.memory_space<vmem>>, vector<8x32xf32>
    tpu.vector_store %arg9[%c8_39, %c0_40], %83 {strides = array<i32>} : memref<16x32xf32, #tpu.memory_space<vmem>>, vector<8x32xf32>,
    return
  }
  func.func @transform_0(%arg0: i32) -> (i32, i32) {
    %c0_i32 = arith.constant 0 : i32
    %c0_i32_0 = arith.constant 0 : i32
    return %arg0, %c0_i32 : i32, i32
  }
  func.func @transform_1(%arg0: i32) -> (i32, i32) {
    %c0_i32 = arith.constant 0 : i32
    %c0_i32_0 = arith.constant 0 : i32
    return %arg0, %c0_i32 : i32, i32
  }
  func.func @transform_2(%arg0: i32) -> (i32, i32) {
    %c0_i32 = arith.constant 0 : i32
    %c0_i32_0 = arith.constant 0 : i32
    return %arg0, %c0_i32 : i32, i32
  }
  func.func @transform_3(%arg0: i32) -> (i32, i32) {
    %c0_i32 = arith.constant 0 : i32
    %c0_i32_0 = arith.constant 0 : i32
    %c0_i32_1 = arith.constant 0 : i32
    return %c0_i32, %c0_i32_0 : i32, i32
  }
  func.func @transform_4(%arg0: i32) -> (i32, i32) {
    %c0_i32 = arith.constant 0 : i32
    %c0_i32_0 = arith.constant 0 : i32
    %c0_i32_1 = arith.constant 0 : i32
    return %c0_i32, %c0_i32_0 : i32, i32
  }
  func.func @transform_5(%arg0: i32) -> (i32, i32) {
    %c0_i32 = arith.constant 0 : i32
    %c0_i32_0 = arith.constant 0 : i32
    %c0_i32_1 = arith.constant 0 : i32
    return %c0_i32, %c0_i32_0 : i32, i32
  }
  func.func @transform_6(%arg0: i32) -> (i32, i32) {
    %c0_i32 = arith.constant 0 : i32
    %c0_i32_0 = arith.constant 0 : i32
    %c0_i32_1 = arith.constant 0 : i32
    return %c0_i32, %c0_i32_0 : i32, i32
  }
  func.func @transform_7(%arg0: i32) -> (i32, i32) {
    %c0_i32 = arith.constant 0 : i32
    %c0_i32_0 = arith.constant 0 : i32
    %c0_i32_1 = arith.constant 0 : i32
    return %c0_i32, %c0_i32_0 : i32, i32
  }
  func.func @transform_8(%arg0: i32) -> (i32, i32) {
    %c0_i32 = arith.constant 0 : i32
    %c0_i32_0 = arith.constant 0 : i32
    return %arg0, %c0_i32 : i32, i32
  }
}

module attributes {stable_mosaic.version = 11 : i64} {
  func.func @_gru_unit_kernel(%arg0: i32, %arg1: memref<16x32xf32, #tpu.memory_space<vmem>>, %arg2: memref<16x32xf32, #tpu.memory_space<vmem>>, %arg3: memref<16x32xf32, #tpu.memory_space<vmem>>, %arg4: memref<32x384xf32, #tpu.memory_space<vmem>>, %arg5: memref<32x384xf32, #tpu.memory_space<vmem>>, %arg6: memref<32x256xf32, #tpu.memory_space<vmem>>, %arg7: memref<32x128xf32, #tpu.memory_space<vmem>>, %arg8: memref<1x384xf32, #tpu.memory_space<vmem>>, %arg9: memref<16x32xf32, #tpu.memory_space<vmem>>) attributes {dimension_semantics = [#tpu.dimension_semantics<parallel>], iteration_bounds = array<i64: 1>, scalar_prefetch = 0 : i64, scratch_operands = 0 : i64, tpu.core_type = #tpu.core_type<tc>, window_params = [{transform_indices = @transform_0, window_bounds = array<i64: 16, 32>}, {transform_indices = @transform_1, window_bounds = array<i64: 16, 32>}, {transform_indices = @transform_2, window_bounds = array<i64: 16, 32>}, {pipeline_mode = #tpu.pipeline_mode<synchronous>, transform_indices = @transform_3, window_bounds = array<i64: 32, 384>}, {pipeline_mode = #tpu.pipeline_mode<synchronous>, transform_indices = @transform_4, window_bounds = array<i64: 32, 384>}, {pipeline_mode = #tpu.pipeline_mode<synchronous>, transform_indices = @transform_5, window_bounds = array<i64: 32, 256>}, {pipeline_mode = #tpu.pipeline_mode<synchronous>, transform_indices = @transform_6, window_bounds = array<i64: 32, 128>}, {pipeline_mode = #tpu.pipeline_mode<synchronous>, transform_indices = @transform_7, window_bounds = array<i64: 1, 384>}, {transform_indices = @transform_8, window_bounds = array<i64: 16, 32>}]} {
    %c0 = arith.constant 0 : index
    %c0_0 = arith.constant 0 : index
    %0 = vector.load %arg4[%c0, %c0_0] : memref<32x384xf32, #tpu.memory_space<vmem>>, vector<32x384xf32>
    %c0_1 = arith.constant 0 : index
    %c0_2 = arith.constant 0 : index
    %1 = vector.load %arg5[%c0_1, %c0_2] : memref<32x384xf32, #tpu.memory_space<vmem>>, vector<32x384xf32>
    %c0_3 = arith.constant 0 : index
    %c0_4 = arith.constant 0 : index
    %2 = vector.load %arg6[%c0_3, %c0_4] : memref<32x256xf32, #tpu.memory_space<vmem>>, vector<32x256xf32>
    %c0_5 = arith.constant 0 : index
    %c0_6 = arith.constant 0 : index
    %3 = vector.load %arg7[%c0_5, %c0_6] : memref<32x128xf32, #tpu.memory_space<vmem>>, vector<32x128xf32>
    %c0_7 = arith.constant 0 : index
    %c0_8 = arith.constant 0 : index
    %4 = vector.load %arg8[%c0_7, %c0_8] : memref<1x384xf32, #tpu.memory_space<vmem>>, vector<1x384xf32>
    %c0_9 = arith.constant 0 : index
    %c0_10 = arith.constant 0 : index
    %5 = vector.load %arg1[%c0_9, %c0_10] : memref<16x32xf32, #tpu.memory_space<vmem>>, vector<8x32xf32>
    %c0_11 = arith.constant 0 : index
    %c0_12 = arith.constant 0 : index
    %6 = vector.load %arg1[%c0_11, %c0_12] : memref<16x32xf32, #tpu.memory_space<vmem>>, vector<8x32xf32>
    %c0_13 = arith.constant 0 : index
    %c0_14 = arith.constant 0 : index
    %7 = vector.load %arg2[%c0_13, %c0_14] : memref<16x32xf32, #tpu.memory_space<vmem>>, vector<8x32xf32>
    %c0_15 = arith.constant 0 : index
    %c0_16 = arith.constant 0 : index
    %8 = vector.load %arg3[%c0_15, %c0_16] : memref<16x32xf32, #tpu.memory_space<vmem>>, vector<8x32xf32>
    %cst = arith.constant dense<0.000000e+00> : vector<8x384xf32>
    %9 = tpu.matmul %7, %0, %cst {dimension_numbers = #tpu.dot_dimension_numbers<[1], [0], [0], [1], [0, 0, 1, 1], [], []>} : vector<8x32xf32>, vector<32x384xf32>, vector<8x384xf32> -> vector<8x384xf32>
    %cst_17 = arith.constant dense<0.000000e+00> : vector<8x384xf32>
    %10 = tpu.matmul %8, %1, %cst_17 {dimension_numbers = #tpu.dot_dimension_numbers<[1], [0], [0], [1], [0, 0, 1, 1], [], []>} : vector<8x32xf32>, vector<32x384xf32>, vector<8x384xf32> -> vector<8x384xf32>
    %11 = arith.addf %9, %10 : vector<8x384xf32>
    %12 = vector.broadcast %4 : vector<1x384xf32> to vector<8x384xf32>
    %13 = arith.addf %11, %12 : vector<8x384xf32>
    %cst_18 = arith.constant dense<0.000000e+00> : vector<8x256xf32>
    %14 = tpu.matmul %6, %2, %cst_18 {dimension_numbers = #tpu.dot_dimension_numbers<[1], [0], [0], [1], [0, 0, 1, 1], [], []>} : vector<8x32xf32>, vector<32x256xf32>, vector<8x256xf32> -> vector<8x256xf32>
    %15 = vector.extract_strided_slice %13 {offsets = [0, 0], sizes = [8, 128], strides = [1, 1]} : vector<8x384xf32> to vector<8x128xf32>
    %16 = vector.extract_strided_slice %14 {offsets = [0, 0], sizes = [8, 128], strides = [1, 1]} : vector<8x256xf32> to vector<8x128xf32>
    %17 = arith.addf %15, %16 : vector<8x128xf32>
    %18 = arith.negf %17 : vector<8x128xf32>
    %19 = math.exp %18 : vector<8x128xf32>
    %cst_19 = arith.constant 1.000000e+00 : f32
    %20 = vector.broadcast %cst_19 : f32 to vector<8x128xf32>
    %21 = arith.addf %20, %19 : vector<8x128xf32>
    %22 = arith.divf %20, %21 : vector<8x128xf32>
    %23 = vector.extract_strided_slice %13 {offsets = [0, 128], sizes = [8, 128], strides = [1, 1]} : vector<8x384xf32> to vector<8x128xf32>
    %24 = vector.extract_strided_slice %14 {offsets = [0, 128], sizes = [8, 128], strides = [1, 1]} : vector<8x256xf32> to vector<8x128xf32>
    %25 = arith.addf %23, %24 : vector<8x128xf32>
    %26 = arith.negf %25 : vector<8x128xf32>
    %27 = math.exp %26 : vector<8x128xf32>
    %cst_20 = arith.constant 1.000000e+00 : f32
    %28 = vector.broadcast %cst_20 : f32 to vector<8x128xf32>
    %29 = arith.addf %28, %27 : vector<8x128xf32>
    %30 = arith.divf %28, %29 : vector<8x128xf32>
    %31 = vector.extract_strided_slice %30 {offsets = [0, 0], sizes = [8, 32], strides = [1, 1]} : vector<8x128xf32> to vector<8x32xf32>
    %32 = arith.mulf %5, %31 : vector<8x32xf32>
    %33 = vector.extract_strided_slice %13 {offsets = [0, 256], sizes = [8, 128], strides = [1, 1]} : vector<8x384xf32> to vector<8x128xf32>
    %cst_21 = arith.constant dense<0.000000e+00> : vector<8x128xf32>
    %34 = tpu.matmul %32, %3, %cst_21 {dimension_numbers = #tpu.dot_dimension_numbers<[1], [0], [0], [1], [0, 0, 1, 1], [], []>} : vector<8x32xf32>, vector<32x128xf32>, vector<8x128xf32> -> vector<8x128xf32>
    %35 = arith.addf %33, %34 : vector<8x128xf32>
    %36 = math.tanh %35 : vector<8x128xf32>
    %37 = vector.extract_strided_slice %22 {offsets = [0, 0], sizes = [8, 32], strides = [1, 1]} : vector<8x128xf32> to vector<8x32xf32>
    %38 = vector.extract_strided_slice %36 {offsets = [0, 0], sizes = [8, 32], strides = [1, 1]} : vector<8x128xf32> to vector<8x32xf32>
    %39 = arith.mulf %38, %37 : vector<8x32xf32>
    %cst_22 = arith.constant 1.000000e+00 : f32
    %40 = vector.broadcast %cst_22 : f32 to vector<8x32xf32>
    %41 = arith.subf %40, %37 : vector<8x32xf32>
    %42 = arith.mulf %5, %41 : vector<8x32xf32>
    %43 = arith.addf %39, %42 : vector<8x32xf32>
    %c0_23 = arith.constant 0 : index
    %c0_24 = arith.constant 0 : index
    %44 = vector.load %arg9[%c0_23, %c0_24] : memref<16x32xf32, #tpu.memory_space<vmem>>, vector<8x32xf32>
    tpu.vector_store %arg9[%c0_23, %c0_24], %43 {strides = array<i32>} : memref<16x32xf32, #tpu.memory_space<vmem>>, vector<8x32xf32>,
    %c8 = arith.constant 8 : index
    %c0_25 = arith.constant 0 : index
    %45 = vector.load %arg1[%c8, %c0_25] : memref<16x32xf32, #tpu.memory_space<vmem>>, vector<8x32xf32>
    %c8_26 = arith.constant 8 : index
    %c0_27 = arith.constant 0 : index
    %46 = vector.load %arg1[%c8_26, %c0_27] : memref<16x32xf32, #tpu.memory_space<vmem>>, vector<8x32xf32>
    %c8_28 = arith.constant 8 : index
    %c0_29 = arith.constant 0 : index
    %47 = vector.load %arg2[%c8_28, %c0_29] : memref<16x32xf32, #tpu.memory_space<vmem>>, vector<8x32xf32>
    %c8_30 = arith.constant 8 : index
    %c0_31 = arith.constant 0 : index
    %48 = vector.load %arg3[%c8_30, %c0_31] : memref<16x32xf32, #tpu.memory_space<vmem>>, vector<8x32xf32>
    %cst_32 = arith.constant dense<0.000000e+00> : vector<8x384xf32>
    %49 = tpu.matmul %47, %0, %cst_32 {dimension_numbers = #tpu.dot_dimension_numbers<[1], [0], [0], [1], [0, 0, 1, 1], [], []>} : vector<8x32xf32>, vector<32x384xf32>, vector<8x384xf32> -> vector<8x384xf32>
    %cst_33 = arith.constant dense<0.000000e+00> : vector<8x384xf32>
    %50 = tpu.matmul %48, %1, %cst_33 {dimension_numbers = #tpu.dot_dimension_numbers<[1], [0], [0], [1], [0, 0, 1, 1], [], []>} : vector<8x32xf32>, vector<32x384xf32>, vector<8x384xf32> -> vector<8x384xf32>
    %51 = arith.addf %49, %50 : vector<8x384xf32>
    %52 = vector.broadcast %4 : vector<1x384xf32> to vector<8x384xf32>
    %53 = arith.addf %51, %52 : vector<8x384xf32>
    %cst_34 = arith.constant dense<0.000000e+00> : vector<8x256xf32>
    %54 = tpu.matmul %46, %2, %cst_34 {dimension_numbers = #tpu.dot_dimension_numbers<[1], [0], [0], [1], [0, 0, 1, 1], [], []>} : vector<8x32xf32>, vector<32x256xf32>, vector<8x256xf32> -> vector<8x256xf32>
    %55 = vector.extract_strided_slice %53 {offsets = [0, 0], sizes = [8, 128], strides = [1, 1]} : vector<8x384xf32> to vector<8x128xf32>
    %56 = vector.extract_strided_slice %54 {offsets = [0, 0], sizes = [8, 128], strides = [1, 1]} : vector<8x256xf32> to vector<8x128xf32>
    %57 = arith.addf %55, %56 : vector<8x128xf32>
    %58 = arith.negf %57 : vector<8x128xf32>
    %59 = math.exp %58 : vector<8x128xf32>
    %cst_35 = arith.constant 1.000000e+00 : f32
    %60 = vector.broadcast %cst_35 : f32 to vector<8x128xf32>
    %61 = arith.addf %60, %59 : vector<8x128xf32>
    %62 = arith.divf %60, %61 : vector<8x128xf32>
    %63 = vector.extract_strided_slice %53 {offsets = [0, 128], sizes = [8, 128], strides = [1, 1]} : vector<8x384xf32> to vector<8x128xf32>
    %64 = vector.extract_strided_slice %54 {offsets = [0, 128], sizes = [8, 128], strides = [1, 1]} : vector<8x256xf32> to vector<8x128xf32>
    %65 = arith.addf %63, %64 : vector<8x128xf32>
    %66 = arith.negf %65 : vector<8x128xf32>
    %67 = math.exp %66 : vector<8x128xf32>
    %cst_36 = arith.constant 1.000000e+00 : f32
    %68 = vector.broadcast %cst_36 : f32 to vector<8x128xf32>
    %69 = arith.addf %68, %67 : vector<8x128xf32>
    %70 = arith.divf %68, %69 : vector<8x128xf32>
    %71 = vector.extract_strided_slice %70 {offsets = [0, 0], sizes = [8, 32], strides = [1, 1]} : vector<8x128xf32> to vector<8x32xf32>
    %72 = arith.mulf %45, %71 : vector<8x32xf32>
    %73 = vector.extract_strided_slice %53 {offsets = [0, 256], sizes = [8, 128], strides = [1, 1]} : vector<8x384xf32> to vector<8x128xf32>
    %cst_37 = arith.constant dense<0.000000e+00> : vector<8x128xf32>
    %74 = tpu.matmul %72, %3, %cst_37 {dimension_numbers = #tpu.dot_dimension_numbers<[1], [0], [0], [1], [0, 0, 1, 1], [], []>} : vector<8x32xf32>, vector<32x128xf32>, vector<8x128xf32> -> vector<8x128xf32>
    %75 = arith.addf %73, %74 : vector<8x128xf32>
    %76 = math.tanh %75 : vector<8x128xf32>
    %77 = vector.extract_strided_slice %62 {offsets = [0, 0], sizes = [8, 32], strides = [1, 1]} : vector<8x128xf32> to vector<8x32xf32>
    %78 = vector.extract_strided_slice %76 {offsets = [0, 0], sizes = [8, 32], strides = [1, 1]} : vector<8x128xf32> to vector<8x32xf32>
    %79 = arith.mulf %78, %77 : vector<8x32xf32>
    %cst_38 = arith.constant 1.000000e+00 : f32
    %80 = vector.broadcast %cst_38 : f32 to vector<8x32xf32>
    %81 = arith.subf %80, %77 : vector<8x32xf32>
    %82 = arith.mulf %45, %81 : vector<8x32xf32>
    %83 = arith.addf %79, %82 : vector<8x32xf32>
    %c8_39 = arith.constant 8 : index
    %c0_40 = arith.constant 0 : index
    %84 = vector.load %arg9[%c8_39, %c0_40] : memref<16x32xf32, #tpu.memory_space<vmem>>, vector<8x32xf32>
    tpu.vector_store %arg9[%c8_39, %c0_40], %83 {strides = array<i32>} : memref<16x32xf32, #tpu.memory_space<vmem>>, vector<8x32xf32>,
    return
  }
  func.func @transform_0(%arg0: i32) -> (i32, i32) {
    %c0_i32 = arith.constant 0 : i32
    %c0_i32_0 = arith.constant 0 : i32
    return %arg0, %c0_i32 : i32, i32
  }
  func.func @transform_1(%arg0: i32) -> (i32, i32) {
    %c0_i32 = arith.constant 0 : i32
    %c0_i32_0 = arith.constant 0 : i32
    return %arg0, %c0_i32 : i32, i32
  }
  func.func @transform_2(%arg0: i32) -> (i32, i32) {
    %c0_i32 = arith.constant 0 : i32
    %c0_i32_0 = arith.constant 0 : i32
    return %arg0, %c0_i32 : i32, i32
  }
  func.func @transform_3(%arg0: i32) -> (i32, i32) {
    %c0_i32 = arith.constant 0 : i32
    %c0_i32_0 = arith.constant 0 : i32
    %c0_i32_1 = arith.constant 0 : i32
    return %c0_i32, %c0_i32_0 : i32, i32
  }
  func.func @transform_4(%arg0: i32) -> (i32, i32) {
    %c0_i32 = arith.constant 0 : i32
    %c0_i32_0 = arith.constant 0 : i32
    %c0_i32_1 = arith.constant 0 : i32
    return %c0_i32, %c0_i32_0 : i32, i32
  }
  func.func @transform_5(%arg0: i32) -> (i32, i32) {
    %c0_i32 = arith.constant 0 : i32
    %c0_i32_0 = arith.constant 0 : i32
    %c0_i32_1 = arith.constant 0 : i32
    return %c0_i32, %c0_i32_0 : i32, i32
  }
  func.func @transform_6(%arg0: i32) -> (i32, i32) {
    %c0_i32 = arith.constant 0 : i32
    %c0_i32_0 = arith.constant 0 : i32
    %c0_i32_1 = arith.constant 0 : i32
    return %c0_i32, %c0_i32_0 : i32, i32
  }
  func.func @transform_7(%arg0: i32) -> (i32, i32) {
    %c0_i32 = arith.constant 0 : i32
    %c0_i32_0 = arith.constant 0 : i32
    %c0_i32_1 = arith.constant 0 : i32
    return %c0_i32, %c0_i32_0 : i32, i32
  }
  func.func @transform_8(%arg0: i32) -> (i32, i32) {
    %c0_i32 = arith.constant 0 : i32
    %c0_i32_0 = arith.constant 0 : i32
    return %arg0, %c0_i32 : i32, i32
  }
}

</mosaic_0001>

<llo_original>
// kernel: tpu_custom_call.1
$region0: #{tpu_custom_call.1}
  #allocation0 [shape = 'u32[]', space=smem, size = 0x4, offset = 0x4, fixed_abs, tag = 'smem constant byte address 0x4 - core index']
  #allocation1 [shape = 'u32[144,128]{1,0:T(1,128)}', space=vmem, size = 0x12000, scoped, tag = 'internal scratch']
  %s0 = inlined_call_operand.hbm [shape: f32[16,32], index: 0, kind: input, shape index: {}]
  %s1 = inlined_call_operand.hbm [shape: f32[16,32], index: 1, kind: input, shape index: {}]
  %s2 = inlined_call_operand.hbm [shape: f32[16,32], index: 2, kind: input, shape index: {}]
  %s3 = inlined_call_operand.hbm [shape: f32[32,384], index: 3, kind: input, shape index: {}]
  %s4 = inlined_call_operand.hbm [shape: f32[32,384], index: 4, kind: input, shape index: {}]
  %s5 = inlined_call_operand.hbm [shape: f32[32,256], index: 5, kind: input, shape index: {}]
  %s6 = inlined_call_operand.hbm [shape: f32[32,128], index: 6, kind: input, shape index: {}]
  %s7 = inlined_call_operand.vmem [shape: f32[1,384], index: 7, kind: input, shape index: {}]
  %s8 = inlined_call_operand.hbm [shape: f32[16,32], index: 8, kind: output, shape index: {}]
  %s9 = sld [smem:[#allocation0]]
  $region70: #{tpu_custom_call.1} parent=0
    _
  %s11 = ssub.s32 1, %s9
  %s12 = scalar_select 0, %s11, %s9
  $region1: #{tpu_custom_call.1} parent=0
    #allocation2 [shape = 'u8[8192]{0}', space=vmem, size = 0x2000, scoped, tag = 'input window, operand 0, single buffered']
    #allocation3 [shape = 's32[1]{0}', space=sflag, size = 0x4, scoped, tag = 'scoped memory for tpu_custom_call.1']
    #allocation4 [shape = 's32[1]{0}', space=sflag, size = 0x4, scoped, tag = 'scoped memory for tpu_custom_call.1']
    #allocation5 [shape = 'u8[8192]{0}', space=vmem, size = 0x2000, scoped, tag = 'input window, operand 1, single buffered']
    #allocation6 [shape = 's32[1]{0}', space=sflag, size = 0x4, scoped, tag = 'scoped memory for tpu_custom_call.1']
    #allocation7 [shape = 'u8[8192]{0}', space=vmem, size = 0x2000, scoped, tag = 'input window, operand 2, single buffered']
    #allocation8 [shape = 'u8[49152]{0}', space=vmem, size = 0xc000, scoped, tag = 'input window, operand 3, single buffered']
    #allocation9 [shape = 's32[1]{0}', space=sflag, size = 0x4, scoped, tag = 'scoped memory for tpu_custom_call.1']
    #allocation10 [shape = 'u8[49152]{0}', space=vmem, size = 0xc000, scoped, tag = 'input window, operand 4, single buffered']
    #allocation11 [shape = 'u8[32768]{0}', space=vmem, size = 0x8000, scoped, tag = 'input window, operand 5, single buffered']
    #allocation12 [shape = 's32[1]{0}', space=sflag, size = 0x4, scoped, tag = 'scoped memory for tpu_custom_call.1']
    #allocation13 [shape = 'u8[16384]{0}', space=vmem, size = 0x4000, scoped, tag = 'input window, operand 6, single buffered']
    #allocation14 [shape = 'u8[8192]{0}', space=vmem, size = 0x2000, scoped, tag = 'output window, operand 0, single buffered']
    %13 = vsyncpa [#allocation3], 0
    %14 = vsyncpa [#allocation6], 0
    %15 = vsyncpa [#allocation9], 0
    %16 = vsyncpa [#allocation12], 0
    %17 = vsyncpa [#allocation4], 0
    // Predicated region
    $region2: #{tpu_custom_call.1} parent=1 // pred_check
      _
    $region3: #{tpu_custom_call.1} parent=1 // pred_check_branch
      %19 = sbr.rel (0) target = $region5
    $region4: #{tpu_custom_call.1} parent=1 // pred_region
      %s21 = ssub.s32 256, 256
      %22 = vsyncadd [#allocation3], %s21
      %s23 = sshll.u32 [#allocation2], 4
      %s24 = int_to_ptr.vmem [resolvable:$true] %s23
      %29 = dma.hbm_to_vmem [thread:$0]  %s0, 256, %s24, [#allocation3], 128, 128, 8
    $region5: #{tpu_custom_call.1} parent=1 // pred_fallthru
      _
    // Predicated region
    $region6: #{tpu_custom_call.1} parent=1 // pred_check
      _
    $region7: #{tpu_custom_call.1} parent=1 // pred_check_branch
      %31 = sbr.rel (0) target = $region9
    $region8: #{tpu_custom_call.1} parent=1 // pred_region
      %s33 = ssub.s32 256, 256
      %34 = vsyncadd [#allocation6], %s33
      %s35 = sshll.u32 [#allocation5], 4
      %s36 = int_to_ptr.vmem [resolvable:$true] %s35
      %41 = dma.hbm_to_vmem [thread:$0]  %s1, 256, %s36, [#allocation6], 128, 128, 8
    $region9: #{tpu_custom_call.1} parent=1 // pred_fallthru
      _
    // Predicated region
    $region10: #{tpu_custom_call.1} parent=1 // pred_check
      _
    $region11: #{tpu_custom_call.1} parent=1 // pred_check_branch
      %43 = sbr.rel (0) target = $region13
    $region12: #{tpu_custom_call.1} parent=1 // pred_region
      %s45 = ssub.s32 256, 256
      %46 = vsyncadd [#allocation6], %s45
      %s47 = sshll.u32 [#allocation7], 4
      %s48 = int_to_ptr.vmem [resolvable:$true] %s47
      %53 = dma.hbm_to_vmem [thread:$0]  %s2, 256, %s48, [#allocation6], 128, 128, 8
    $region13: #{tpu_custom_call.1} parent=1 // pred_fallthru
      _
    // Predicated region
    $region14: #{tpu_custom_call.1} parent=1 // pred_check
      _
    $region15: #{tpu_custom_call.1} parent=1 // pred_check_branch
      %55 = sbr.rel (0) target = $region17
    $region16: #{tpu_custom_call.1} parent=1 // pred_region
      %s57 = ssub.s32 1536, 1536
      %58 = vsyncadd [#allocation9], %s57
      %s59 = sshll.u32 [#allocation8], 4
      %s60 = int_to_ptr.vmem [resolvable:$true] %s59
      %65 = dma.hbm_to_vmem [thread:$0]  %s3, 1536, %s60, [#allocation9], 384, 384, 24
    $region17: #{tpu_custom_call.1} parent=1 // pred_fallthru
      _
    // Predicated region
    $region18: #{tpu_custom_call.1} parent=1 // pred_check
      _
    $region19: #{tpu_custom_call.1} parent=1 // pred_check_branch
      %67 = sbr.rel (0) target = $region21
    $region20: #{tpu_custom_call.1} parent=1 // pred_region
      %s69 = ssub.s32 1536, 1536
      %70 = vsyncadd [#allocation9], %s69
      %s71 = sshll.u32 [#allocation10], 4
      %s72 = int_to_ptr.vmem [resolvable:$true] %s71
      %77 = dma.hbm_to_vmem [thread:$0]  %s4, 1536, %s72, [#allocation9], 384, 384, 24
    $region21: #{tpu_custom_call.1} parent=1 // pred_fallthru
      _
    // Predicated region
    $region22: #{tpu_custom_call.1} parent=1 // pred_check
      _
    $region23: #{tpu_custom_call.1} parent=1 // pred_check_branch
      %79 = sbr.rel (0) target = $region25
    $region24: #{tpu_custom_call.1} parent=1 // pred_region
      %s81 = ssub.s32 1024, 1024
      %82 = vsyncadd [#allocation12], %s81
      %s83 = sshll.u32 [#allocation11], 4
      %s84 = int_to_ptr.vmem [resolvable:$true] %s83
      %89 = dma.hbm_to_vmem [thread:$0]  %s5, 1024, %s84, [#allocation12], 256, 256, 16
    $region25: #{tpu_custom_call.1} parent=1 // pred_fallthru
      _
    // Predicated region
    $region26: #{tpu_custom_call.1} parent=1 // pred_check
      _
    $region27: #{tpu_custom_call.1} parent=1 // pred_check_branch
      %91 = sbr.rel (0) target = $region29
    $region28: #{tpu_custom_call.1} parent=1 // pred_region
      %s93 = ssub.s32 512, 512
      %94 = vsyncadd [#allocation12], %s93
      %s95 = sshll.u32 [#allocation13], 4
      %s96 = int_to_ptr.vmem [resolvable:$true] %s95
      %101 = dma.hbm_to_vmem [thread:$0]  %s6, 512, %s96, [#allocation12], 128, 128, 8
    $region29: #{tpu_custom_call.1} parent=1 // pred_fallthru
      _
    // Predicated region
    $region30: #{tpu_custom_call.1} parent=1 // pred_check
      _
    $region31: #{tpu_custom_call.1} parent=1 // pred_check_branch
      %103 = sbr.rel (0) target = $region33
    $region32: #{tpu_custom_call.1} parent=1 // pred_region
      _
    $region33: #{tpu_custom_call.1} parent=1 // pred_fallthru
      _
    // Predicated region
    $region34: #{tpu_custom_call.1} parent=1 // pred_check
      _
    $region35: #{tpu_custom_call.1} parent=1 // pred_check_branch
      %105 = sbr.rel (0) target = $region37
    $region36: #{tpu_custom_call.1} parent=1 // pred_region
      %106 = dma.done [#allocation3], 256
    $region37: #{tpu_custom_call.1} parent=1 // pred_fallthru
      _
    // Predicated region
    $region38: #{tpu_custom_call.1} parent=1 // pred_check
      _
    $region39: #{tpu_custom_call.1} parent=1 // pred_check_branch
      %108 = sbr.rel (0) target = $region41
    $region40: #{tpu_custom_call.1} parent=1 // pred_region
      %109 = dma.done [#allocation6], 256
    $region41: #{tpu_custom_call.1} parent=1 // pred_fallthru
      _
    // Predicated region
    $region42: #{tpu_custom_call.1} parent=1 // pred_check
      _
    $region43: #{tpu_custom_call.1} parent=1 // pred_check_branch
      %111 = sbr.rel (0) target = $region45
    $region44: #{tpu_custom_call.1} parent=1 // pred_region
      %112 = dma.done [#allocation6], 256
    $region45: #{tpu_custom_call.1} parent=1 // pred_fallthru
      _
    // Predicated region
    $region46: #{tpu_custom_call.1} parent=1 // pred_check
      _
    $region47: #{tpu_custom_call.1} parent=1 // pred_check_branch
      %114 = sbr.rel (0) target = $region49
    $region48: #{tpu_custom_call.1} parent=1 // pred_region
      %115 = dma.done [#allocation9], 1536
    $region49: #{tpu_custom_call.1} parent=1 // pred_fallthru
      _
    // Predicated region
    $region50: #{tpu_custom_call.1} parent=1 // pred_check
      _
    $region51: #{tpu_custom_call.1} parent=1 // pred_check_branch
      %117 = sbr.rel (0) target = $region53
    $region52: #{tpu_custom_call.1} parent=1 // pred_region
      %118 = dma.done [#allocation9], 1536
    $region53: #{tpu_custom_call.1} parent=1 // pred_fallthru
      _
    // Predicated region
    $region54: #{tpu_custom_call.1} parent=1 // pred_check
      _
    $region55: #{tpu_custom_call.1} parent=1 // pred_check_branch
      %120 = sbr.rel (0) target = $region57
    $region56: #{tpu_custom_call.1} parent=1 // pred_region
      %121 = dma.done [#allocation12], 1024
    $region57: #{tpu_custom_call.1} parent=1 // pred_fallthru
      _
    // Predicated region
    $region58: #{tpu_custom_call.1} parent=1 // pred_check
      _
    $region59: #{tpu_custom_call.1} parent=1 // pred_check_branch
      %123 = sbr.rel (0) target = $region61
    $region60: #{tpu_custom_call.1} parent=1 // pred_region
      %124 = dma.done [#allocation12], 512
    $region61: #{tpu_custom_call.1} parent=1 // pred_fallthru
      _
    %v125 = vld [vmem:[#allocation8] sm:$0xff]
    %v126 = vld [vmem:[#allocation8 + $0x8] sm:$0xff]
    %v127 = vld [vmem:[#allocation8 + $0x10] sm:$0xff]
    %v128 = vld [vmem:[#allocation8 + $0x18] sm:$0xff]
    %v129 = vld [vmem:[#allocation8 + $0x20] sm:$0xff]
    %v130 = vld [vmem:[#allocation8 + $0x28] sm:$0xff]
    %v131 = vld [vmem:[#allocation8 + $0x30] sm:$0xff]
    %v132 = vld [vmem:[#allocation8 + $0x38] sm:$0xff]
    %v133 = vld [vmem:[#allocation8 + $0x40] sm:$0xff]
    %v134 = vld [vmem:[#allocation8 + $0x48] sm:$0xff]
    %v135 = vld [vmem:[#allocation8 + $0x50] sm:$0xff]
    %v136 = vld [vmem:[#allocation8 + $0x58] sm:$0xff]
    %v137 = vld [vmem:[#allocation10] sm:$0xff]
    %v138 = vld [vmem:[#allocation10 + $0x8] sm:$0xff]
    %v139 = vld [vmem:[#allocation10 + $0x10] sm:$0xff]
    %v140 = vld [vmem:[#allocation10 + $0x18] sm:$0xff]
    %v141 = vld [vmem:[#allocation10 + $0x20] sm:$0xff]
    %v142 = vld [vmem:[#allocation10 + $0x28] sm:$0xff]
    %v143 = vld [vmem:[#allocation10 + $0x30] sm:$0xff]
    %v144 = vld [vmem:[#allocation10 + $0x38] sm:$0xff]
    %v145 = vld [vmem:[#allocation10 + $0x40] sm:$0xff]
    %v146 = vld [vmem:[#allocation10 + $0x48] sm:$0xff]
    %v147 = vld [vmem:[#allocation10 + $0x50] sm:$0xff]
    %v148 = vld [vmem:[#allocation10 + $0x58] sm:$0xff]
    %v149 = vld [vmem:[#allocation11] sm:$0xff]
    %v150 = vld [vmem:[#allocation11 + $0x8] sm:$0xff]
    %v151 = vld [vmem:[#allocation11 + $0x10] sm:$0xff]
    %v152 = vld [vmem:[#allocation11 + $0x18] sm:$0xff]
    %v153 = vld [vmem:[#allocation11 + $0x20] sm:$0xff]
    %v154 = vld [vmem:[#allocation11 + $0x28] sm:$0xff]
    %v155 = vld [vmem:[#allocation11 + $0x30] sm:$0xff]
    %v156 = vld [vmem:[#allocation11 + $0x38] sm:$0xff]
    %v157 = vld [vmem:[#allocation13] sm:$0xff]
    %v158 = vld [vmem:[#allocation13 + $0x8] sm:$0xff]
    %v159 = vld [vmem:[#allocation13 + $0x10] sm:$0xff]
    %v160 = vld [vmem:[#allocation13 + $0x18] sm:$0xff]
    %v161 = vld [vmem:[%s7] sm:$0x7]
    %v162 = vld [vmem:[#allocation2] sm:$0xff]
    %v163 = vld [vmem:[#allocation5] sm:$0xff]
    %v164 = vld [vmem:[#allocation7] sm:$0xff]
    %vm165 = vcmask 261120
    %v167 = vsel %vm165, %v164, 0
    %169 = vmatprep.subr.mxu0 %v138
    %170 = vmatpush1.msra.mxu0 %v137
    %171 = vmatprep.subr.mxu0 %v141
    %172 = vmatpush1.msra.mxu0 %v140
    %173 = vmatprep.subr.mxu0 %v144
    %174 = vmatpush1.msra.mxu0 %v143
    %175 = vmatprep.subr.mxu0 %v147
    %176 = vmatpush1.msra.mxu0 %v146
    %177 = vmatprep.subr.mxu0 0.0
    %178 = vmatpush1.msra.mxu0 0.0
    %179 = vmatprep.subr.mxu0 0.0
    %180 = vmatpush1.msra.mxu0 0.0
    %181 = vmatprep.subr.mxu0 0.0
    %182 = vmatpush1.msra.mxu0 0.0
    %183 = vmatprep.subr.mxu0 0.0
    %184 = vmatpush1.msra.mxu0 0.0
    %185 = vmatprep.subr.mxu0 0.0
    %186 = vmatpush1.msra.mxu0 0.0
    %187 = vmatprep.subr.mxu0 0.0
    %188 = vmatpush1.msra.mxu0 0.0
    %189 = vmatprep.subr.mxu0 0.0
    %190 = vmatpush1.msra.mxu0 0.0
    %191 = vmatprep.subr.mxu0 0.0
    %192 = vmatpush1.msra.mxu0 0.0
    %193 = vmatprep.subr.mxu0 0.0
    %194 = vmatpush1.msra.mxu0 0.0
    %195 = vmatprep.subr.mxu0 0.0
    %196 = vmatpush1.msra.mxu0 0.0
    %197 = vmatprep.subr.mxu0 0.0
    %198 = vmatpush1.msra.mxu0 0.0
    %199 = vmatprep.subr.mxu0 0.0
    %200 = vmatpush1.msra.mxu0 0.0
    %201 = vmatprep.subr.mxu0 0.0
    %202 = vmatpush1.msra.mxu0 0.0
    %203 = vmatprep.subr.mxu0 0.0
    %204 = vmatpush1.msra.mxu0 0.0
    %205 = vmatprep.subr.mxu0 0.0
    %206 = vmatpush1.msra.mxu0 0.0
    %207 = vmatprep.subr.mxu0 0.0
    %208 = vmatpush1.msra.mxu0 0.0
    %209 = vmatprep.subr.mxu0 0.0
    %210 = vmatpush1.msra.mxu0 0.0
    %211 = vmatprep.subr.mxu0 0.0
    %212 = vmatpush1.msra.mxu0 0.0
    %213 = vmatprep.subr.mxu0 0.0
    %214 = vmatpush1.msra.mxu0 0.0
    %215 = vmatprep.subr.mxu0 0.0
    %216 = vmatpush1.msra.mxu0 0.0
    %217 = vmatprep.subr.mxu0 0.0
    %218 = vmatpush1.msra.mxu0 0.0
    %219 = vmatprep.subr.mxu0 0.0
    %220 = vmatpush1.msra.mxu0 0.0
    %221 = vmatprep.subr.mxu0 0.0
    %222 = vmatpush1.msra.mxu0 0.0
    %223 = vmatprep.subr.mxu0 0.0
    %224 = vmatpush1.msra.mxu0 0.0
    %225 = vmatprep.subr.mxu0 0.0
    %226 = vmatpush1.msra.mxu0 0.0
    %227 = vmatprep.subr.mxu0 0.0
    %228 = vmatpush1.msra.mxu0 0.0
    %229 = vmatprep.subr.mxu0 0.0
    %230 = vmatpush1.msra.mxu0 0.0
    %231 = vmatprep.subr.mxu0 0.0
    %232 = vmatpush1.msra.mxu0 0.0
    %233 = vmatprep.mubr.f32.mxu0 0.0
    %234 = vmatmul.mubr.f32.gmra.mrb[0].mxu0 %v167
    %v235 = vpop.f32.mrb[0].mxu0
    %v236 = vadd.f32 0.0, %v235
    %v237 = vpop.f32.mrb[0].mxu0
    %v238 = vadd.f32 0.0, %v237
    %239 = vdwg.mxu0
    %240 = vmatprep.subr.mxu0 0.0
    %241 = vmatpush1.msra.mxu0 %v139
    %242 = vmatprep.subr.mxu0 0.0
    %243 = vmatpush1.msra.mxu0 %v142
    %244 = vmatprep.subr.mxu0 0.0
    %245 = vmatpush1.msra.mxu0 %v145
    %246 = vmatprep.subr.mxu0 0.0
    %247 = vmatpush1.msra.mxu0 %v148
    %248 = vmatprep.subr.mxu0 0.0
    %249 = vmatpush1.msra.mxu0 0.0
    %250 = vmatprep.subr.mxu0 0.0
    %251 = vmatpush1.msra.mxu0 0.0
    %252 = vmatprep.subr.mxu0 0.0
    %253 = vmatpush1.msra.mxu0 0.0
    %254 = vmatprep.subr.mxu0 0.0
    %255 = vmatpush1.msra.mxu0 0.0
    %256 = vmatprep.subr.mxu0 0.0
    %257 = vmatpush1.msra.mxu0 0.0
    %258 = vmatprep.subr.mxu0 0.0
    %259 = vmatpush1.msra.mxu0 0.0
    %260 = vmatprep.subr.mxu0 0.0
    %261 = vmatpush1.msra.mxu0 0.0
    %262 = vmatprep.subr.mxu0 0.0
    %263 = vmatpush1.msra.mxu0 0.0
    %264 = vmatprep.subr.mxu0 0.0
    %265 = vmatpush1.msra.mxu0 0.0
    %266 = vmatprep.subr.mxu0 0.0
    %267 = vmatpush1.msra.mxu0 0.0
    %268 = vmatprep.subr.mxu0 0.0
    %269 = vmatpush1.msra.mxu0 0.0
    %270 = vmatprep.subr.mxu0 0.0
    %271 = vmatpush1.msra.mxu0 0.0
    %272 = vmatprep.subr.mxu0 0.0
    %273 = vmatpush1.msra.mxu0 0.0
    %274 = vmatprep.subr.mxu0 0.0
    %275 = vmatpush1.msra.mxu0 0.0
    %276 = vmatprep.subr.mxu0 0.0
    %277 = vmatpush1.msra.mxu0 0.0
    %278 = vmatprep.subr.mxu0 0.0
    %279 = vmatpush1.msra.mxu0 0.0
    %280 = vmatprep.subr.mxu0 0.0
    %281 = vmatpush1.msra.mxu0 0.0
    %282 = vmatprep.subr.mxu0 0.0
    %283 = vmatpush1.msra.mxu0 0.0
    %284 = vmatprep.subr.mxu0 0.0
    %285 = vmatpush1.msra.mxu0 0.0
    %286 = vmatprep.subr.mxu0 0.0
    %287 = vmatpush1.msra.mxu0 0.0
    %288 = vmatprep.subr.mxu0 0.0
    %289 = vmatpush1.msra.mxu0 0.0
    %290 = vmatprep.subr.mxu0 0.0
    %291 = vmatpush1.msra.mxu0 0.0
    %292 = vmatprep.subr.mxu0 0.0
    %293 = vmatpush1.msra.mxu0 0.0
    %294 = vmatprep.subr.mxu0 0.0
    %295 = vmatpush1.msra.mxu0 0.0
    %296 = vmatprep.subr.mxu0 0.0
    %297 = vmatpush1.msra.mxu0 0.0
    %298 = vmatprep.subr.mxu0 0.0
    %299 = vmatpush1.msra.mxu0 0.0
    %300 = vmatprep.subr.mxu0 0.0
    %301 = vmatpush1.msra.mxu0 0.0
    %302 = vmatprep.subr.mxu0 0.0
    %303 = vmatpush1.msra.mxu0 0.0
    %304 = vmatprep.mubr.f32.mxu0 0.0
    %305 = vmatmul.mubr.f32.gmra.mrb[0].mxu0 %v167
    %v306 = vpop.f32.mrb[0].mxu0
    %v307 = vadd.f32 0.0, %v306
    %v308 = vpop.f32.mrb[0].mxu0
    %309 = vdwg.mxu0
    %v311 = vsel %vm165, %v163, 0
    %313 = vmatprep.subr.mxu0 %v126
    %314 = vmatpush1.msra.mxu0 %v125
    %315 = vmatprep.subr.mxu0 %v129
    %316 = vmatpush1.msra.mxu0 %v128
    %317 = vmatprep.subr.mxu0 %v132
    %318 = vmatpush1.msra.mxu0 %v131
    %319 = vmatprep.subr.mxu0 %v135
    %320 = vmatpush1.msra.mxu0 %v134
    %321 = vmatprep.subr.mxu0 0.0
    %322 = vmatpush1.msra.mxu0 0.0
    %323 = vmatprep.subr.mxu0 0.0
    %324 = vmatpush1.msra.mxu0 0.0
    %325 = vmatprep.subr.mxu0 0.0
    %326 = vmatpush1.msra.mxu0 0.0
    %327 = vmatprep.subr.mxu0 0.0
    %328 = vmatpush1.msra.mxu0 0.0
    %329 = vmatprep.subr.mxu0 0.0
    %330 = vmatpush1.msra.mxu0 0.0
    %331 = vmatprep.subr.mxu0 0.0
    %332 = vmatpush1.msra.mxu0 0.0
    %333 = vmatprep.subr.mxu0 0.0
    %334 = vmatpush1.msra.mxu0 0.0
    %335 = vmatprep.subr.mxu0 0.0
    %336 = vmatpush1.msra.mxu0 0.0
    %337 = vmatprep.subr.mxu0 0.0
    %338 = vmatpush1.msra.mxu0 0.0
    %339 = vmatprep.subr.mxu0 0.0
    %340 = vmatpush1.msra.mxu0 0.0
    %341 = vmatprep.subr.mxu0 0.0
    %342 = vmatpush1.msra.mxu0 0.0
    %343 = vmatprep.subr.mxu0 0.0
    %344 = vmatpush1.msra.mxu0 0.0
    %345 = vmatprep.subr.mxu0 0.0
    %346 = vmatpush1.msra.mxu0 0.0
    %347 = vmatprep.subr.mxu0 0.0
    %348 = vmatpush1.msra.mxu0 0.0
    %349 = vmatprep.subr.mxu0 0.0
    %350 = vmatpush1.msra.mxu0 0.0
    %351 = vmatprep.subr.mxu0 0.0
    %352 = vmatpush1.msra.mxu0 0.0
    %353 = vmatprep.subr.mxu0 0.0
    %354 = vmatpush1.msra.mxu0 0.0
    %355 = vmatprep.subr.mxu0 0.0
    %356 = vmatpush1.msra.mxu0 0.0
    %357 = vmatprep.subr.mxu0 0.0
    %358 = vmatpush1.msra.mxu0 0.0
    %359 = vmatprep.subr.mxu0 0.0
    %360 = vmatpush1.msra.mxu0 0.0
    %361 = vmatprep.subr.mxu0 0.0
    %362 = vmatpush1.msra.mxu0 0.0
    %363 = vmatprep.subr.mxu0 0.0
    %364 = vmatpush1.msra.mxu0 0.0
    %365 = vmatprep.subr.mxu0 0.0
    %366 = vmatpush1.msra.mxu0 0.0
    %367 = vmatprep.subr.mxu0 0.0
    %368 = vmatpush1.msra.mxu0 0.0
    %369 = vmatprep.subr.mxu0 0.0
    %370 = vmatpush1.msra.mxu0 0.0
    %371 = vmatprep.subr.mxu0 0.0
    %372 = vmatpush1.msra.mxu0 0.0
    %373 = vmatprep.subr.mxu0 0.0
    %374 = vmatpush1.msra.mxu0 0.0
    %375 = vmatprep.subr.mxu0 0.0
    %376 = vmatpush1.msra.mxu0 0.0
    %377 = vmatprep.mubr.f32.mxu0 0.0
    %378 = vmatmul.mubr.f32.gmra.mrb[0].mxu0 %v311
    %v379 = vpop.f32.mrb[0].mxu0
    %v380 = vadd.f32 %v236, %v379
    %v381 = vpop.f32.mrb[0].mxu0
    %v382 = vadd.f32 %v238, %v381
    %383 = vdwg.mxu0
    %384 = vmatprep.subr.mxu0 0.0
    %385 = vmatpush1.msra.mxu0 %v127
    %386 = vmatprep.subr.mxu0 0.0
    %387 = vmatpush1.msra.mxu0 %v130
    %388 = vmatprep.subr.mxu0 0.0
    %389 = vmatpush1.msra.mxu0 %v133
    %390 = vmatprep.subr.mxu0 0.0
    %391 = vmatpush1.msra.mxu0 %v136
    %392 = vmatprep.subr.mxu0 0.0
    %393 = vmatpush1.msra.mxu0 0.0
    %394 = vmatprep.subr.mxu0 0.0
    %395 = vmatpush1.msra.mxu0 0.0
    %396 = vmatprep.subr.mxu0 0.0
    %397 = vmatpush1.msra.mxu0 0.0
    %398 = vmatprep.subr.mxu0 0.0
    %399 = vmatpush1.msra.mxu0 0.0
    %400 = vmatprep.subr.mxu0 0.0
    %401 = vmatpush1.msra.mxu0 0.0
    %402 = vmatprep.subr.mxu0 0.0
    %403 = vmatpush1.msra.mxu0 0.0
    %404 = vmatprep.subr.mxu0 0.0
    %405 = vmatpush1.msra.mxu0 0.0
    %406 = vmatprep.subr.mxu0 0.0
    %407 = vmatpush1.msra.mxu0 0.0
    %408 = vmatprep.subr.mxu0 0.0
    %409 = vmatpush1.msra.mxu0 0.0
    %410 = vmatprep.subr.mxu0 0.0
    %411 = vmatpush1.msra.mxu0 0.0
    %412 = vmatprep.subr.mxu0 0.0
    %413 = vmatpush1.msra.mxu0 0.0
    %414 = vmatprep.subr.mxu0 0.0
    %415 = vmatpush1.msra.mxu0 0.0
    %416 = vmatprep.subr.mxu0 0.0
    %417 = vmatpush1.msra.mxu0 0.0
    %418 = vmatprep.subr.mxu0 0.0
    %419 = vmatpush1.msra.mxu0 0.0
    %420 = vmatprep.subr.mxu0 0.0
    %421 = vmatpush1.msra.mxu0 0.0
    %422 = vmatprep.subr.mxu0 0.0
    %423 = vmatpush1.msra.mxu0 0.0
    %424 = vmatprep.subr.mxu0 0.0
    %425 = vmatpush1.msra.mxu0 0.0
    %426 = vmatprep.subr.mxu0 0.0
    %427 = vmatpush1.msra.mxu0 0.0
    %428 = vmatprep.subr.mxu0 0.0
    %429 = vmatpush1.msra.mxu0 0.0
    %430 = vmatprep.subr.mxu0 0.0
    %431 = vmatpush1.msra.mxu0 0.0
    %432 = vmatprep.subr.mxu0 0.0
    %433 = vmatpush1.msra.mxu0 0.0
    %434 = vmatprep.subr.mxu0 0.0
    %435 = vmatpush1.msra.mxu0 0.0
    %436 = vmatprep.subr.mxu0 0.0
    %437 = vmatpush1.msra.mxu0 0.0
    %438 = vmatprep.subr.mxu0 0.0
    %439 = vmatpush1.msra.mxu0 0.0
    %440 = vmatprep.subr.mxu0 0.0
    %441 = vmatpush1.msra.mxu0 0.0
    %442 = vmatprep.subr.mxu0 0.0
    %443 = vmatpush1.msra.mxu0 0.0
    %444 = vmatprep.subr.mxu0 0.0
    %445 = vmatpush1.msra.mxu0 0.0
    %446 = vmatprep.subr.mxu0 0.0
    %447 = vmatpush1.msra.mxu0 0.0
    %448 = vmatprep.mubr.f32.mxu0 0.0
    %449 = vmatmul.mubr.f32.gmra.mrb[0].mxu0 %v311
    %v450 = vpop.f32.mrb[0].mxu0
    %v451 = vadd.f32 %v307, %v450
    %v452 = vpop.f32.mrb[0].mxu0
    %453 = vdwg.mxu0
    %v455 = vlaneseq
    %v456 = vshrl.u32 %v455, 7
    %v457 = vsub.s32 0, %v456
    %v458 = vrot.slane %v161, %v457
    %v459 = vlaneseq
    %v460 = vshrl.u32 %v459, 7
    %v461 = vsub.s32 1, %v460
    %v462 = vrot.slane %v161, %v461
    %v463 = vlaneseq
    %v464 = vshrl.u32 %v463, 7
    %v465 = vsub.s32 2, %v464
    %v466 = vrot.slane %v161, %v465
    %v470 = vadd.f32 %v380, %v458
    %v471 = vadd.f32 %v382, %v462
    %v472 = vadd.f32 %v451, %v466
    %v474 = vsel %vm165, %v162, 0
    %476 = vmatprep.subr.mxu0 %v150
    %477 = vmatpush1.msra.mxu0 %v149
    %478 = vmatprep.subr.mxu0 %v152
    %479 = vmatpush1.msra.mxu0 %v151
    %480 = vmatprep.subr.mxu0 %v154
    %481 = vmatpush1.msra.mxu0 %v153
    %482 = vmatprep.subr.mxu0 %v156
    %483 = vmatpush1.msra.mxu0 %v155
    %484 = vmatprep.subr.mxu0 0.0
    %485 = vmatpush1.msra.mxu0 0.0
    %486 = vmatprep.subr.mxu0 0.0
    %487 = vmatpush1.msra.mxu0 0.0
    %488 = vmatprep.subr.mxu0 0.0
    %489 = vmatpush1.msra.mxu0 0.0
    %490 = vmatprep.subr.mxu0 0.0
    %491 = vmatpush1.msra.mxu0 0.0
    %492 = vmatprep.subr.mxu0 0.0
    %493 = vmatpush1.msra.mxu0 0.0
    %494 = vmatprep.subr.mxu0 0.0
    %495 = vmatpush1.msra.mxu0 0.0
    %496 = vmatprep.subr.mxu0 0.0
    %497 = vmatpush1.msra.mxu0 0.0
    %498 = vmatprep.subr.mxu0 0.0
    %499 = vmatpush1.msra.mxu0 0.0
    %500 = vmatprep.subr.mxu0 0.0
    %501 = vmatpush1.msra.mxu0 0.0
    %502 = vmatprep.subr.mxu0 0.0
    %503 = vmatpush1.msra.mxu0 0.0
    %504 = vmatprep.subr.mxu0 0.0
    %505 = vmatpush1.msra.mxu0 0.0
    %506 = vmatprep.subr.mxu0 0.0
    %507 = vmatpush1.msra.mxu0 0.0
    %508 = vmatprep.subr.mxu0 0.0
    %509 = vmatpush1.msra.mxu0 0.0
    %510 = vmatprep.subr.mxu0 0.0
    %511 = vmatpush1.msra.mxu0 0.0
    %512 = vmatprep.subr.mxu0 0.0
    %513 = vmatpush1.msra.mxu0 0.0
    %514 = vmatprep.subr.mxu0 0.0
    %515 = vmatpush1.msra.mxu0 0.0
    %516 = vmatprep.subr.mxu0 0.0
    %517 = vmatpush1.msra.mxu0 0.0
    %518 = vmatprep.subr.mxu0 0.0
    %519 = vmatpush1.msra.mxu0 0.0
    %520 = vmatprep.subr.mxu0 0.0
    %521 = vmatpush1.msra.mxu0 0.0
    %522 = vmatprep.subr.mxu0 0.0
    %523 = vmatpush1.msra.mxu0 0.0
    %524 = vmatprep.subr.mxu0 0.0
    %525 = vmatpush1.msra.mxu0 0.0
    %526 = vmatprep.subr.mxu0 0.0
    %527 = vmatpush1.msra.mxu0 0.0
    %528 = vmatprep.subr.mxu0 0.0
    %529 = vmatpush1.msra.mxu0 0.0
    %530 = vmatprep.subr.mxu0 0.0
    %531 = vmatpush1.msra.mxu0 0.0
    %532 = vmatprep.subr.mxu0 0.0
    %533 = vmatpush1.msra.mxu0 0.0
    %534 = vmatprep.subr.mxu0 0.0
    %535 = vmatpush1.msra.mxu0 0.0
    %536 = vmatprep.subr.mxu0 0.0
    %537 = vmatpush1.msra.mxu0 0.0
    %538 = vmatprep.subr.mxu0 0.0
    %539 = vmatpush1.msra.mxu0 0.0
    %540 = vmatprep.mubr.f32.mxu0 0.0
    %541 = vmatmul.mubr.f32.gmra.mrb[0].mxu0 %v474
    %v542 = vpop.f32.mrb[0].mxu0
    %v543 = vadd.f32 0.0, %v542
    %v544 = vpop.f32.mrb[0].mxu0
    %v545 = vadd.f32 0.0, %v544
    %546 = vdwg.mxu0
    %v547 = vadd.f32 %v470, %v543
    %v548 = vxor.u32 %v547, 2147483648
    %v549 = vmul.f32 %v548, 1.442695
    %v550 = vpow.pop %v549
    %v551 = vadd.f32 %v550, 1.0
    %v552 = vrcp.pop %v551
    %v553 = vmul.f32 1.0, %v552
    %v554 = vadd.f32 %v471, %v545
    %v555 = vxor.u32 %v554, 2147483648
    %v556 = vmul.f32 %v555, 1.442695
    %v557 = vpow.pop %v556
    %v558 = vadd.f32 %v557, 1.0
    %v559 = vrcp.pop %v558
    %v560 = vmul.f32 1.0, %v559
    %v561 = vmul.f32 %v162, %v560
    %v563 = vsel %vm165, %v561, 0
    %565 = vmatprep.subr.mxu0 0.0
    %566 = vmatpush1.msra.mxu0 %v157
    %567 = vmatprep.subr.mxu0 0.0
    %568 = vmatpush1.msra.mxu0 %v158
    %569 = vmatprep.subr.mxu0 0.0
    %570 = vmatpush1.msra.mxu0 %v159
    %571 = vmatprep.subr.mxu0 0.0
    %572 = vmatpush1.msra.mxu0 %v160
    %573 = vmatprep.subr.mxu0 0.0
    %574 = vmatpush1.msra.mxu0 0.0
    %575 = vmatprep.subr.mxu0 0.0
    %576 = vmatpush1.msra.mxu0 0.0
    %577 = vmatprep.subr.mxu0 0.0
    %578 = vmatpush1.msra.mxu0 0.0
    %579 = vmatprep.subr.mxu0 0.0
    %580 = vmatpush1.msra.mxu0 0.0
    %581 = vmatprep.subr.mxu0 0.0
    %582 = vmatpush1.msra.mxu0 0.0
    %583 = vmatprep.subr.mxu0 0.0
    %584 = vmatpush1.msra.mxu0 0.0
    %585 = vmatprep.subr.mxu0 0.0
    %586 = vmatpush1.msra.mxu0 0.0
    %587 = vmatprep.subr.mxu0 0.0
    %588 = vmatpush1.msra.mxu0 0.0
    %589 = vmatprep.subr.mxu0 0.0
    %590 = vmatpush1.msra.mxu0 0.0
    %591 = vmatprep.subr.mxu0 0.0
    %592 = vmatpush1.msra.mxu0 0.0
    %593 = vmatprep.subr.mxu0 0.0
    %594 = vmatpush1.msra.mxu0 0.0
    %595 = vmatprep.subr.mxu0 0.0
    %596 = vmatpush1.msra.mxu0 0.0
    %597 = vmatprep.subr.mxu0 0.0
    %598 = vmatpush1.msra.mxu0 0.0
    %599 = vmatprep.subr.mxu0 0.0
    %600 = vmatpush1.msra.mxu0 0.0
    %601 = vmatprep.subr.mxu0 0.0
    %602 = vmatpush1.msra.mxu0 0.0
    %603 = vmatprep.subr.mxu0 0.0
    %604 = vmatpush1.msra.mxu0 0.0
    %605 = vmatprep.subr.mxu0 0.0
    %606 = vmatpush1.msra.mxu0 0.0
    %607 = vmatprep.subr.mxu0 0.0
    %608 = vmatpush1.msra.mxu0 0.0
    %609 = vmatprep.subr.mxu0 0.0
    %610 = vmatpush1.msra.mxu0 0.0
    %611 = vmatprep.subr.mxu0 0.0
    %612 = vmatpush1.msra.mxu0 0.0
    %613 = vmatprep.subr.mxu0 0.0
    %614 = vmatpush1.msra.mxu0 0.0
    %615 = vmatprep.subr.mxu0 0.0
    %616 = vmatpush1.msra.mxu0 0.0
    %617 = vmatprep.subr.mxu0 0.0
    %618 = vmatpush1.msra.mxu0 0.0
    %619 = vmatprep.subr.mxu0 0.0
    %620 = vmatpush1.msra.mxu0 0.0
    %621 = vmatprep.subr.mxu0 0.0
    %622 = vmatpush1.msra.mxu0 0.0
    %623 = vmatprep.subr.mxu0 0.0
    %624 = vmatpush1.msra.mxu0 0.0
    %625 = vmatprep.subr.mxu0 0.0
    %626 = vmatpush1.msra.mxu0 0.0
    %627 = vmatprep.subr.mxu0 0.0
    %628 = vmatpush1.msra.mxu0 0.0
    %629 = vmatprep.mubr.f32.mxu0 0.0
    %630 = vmatmul.mubr.f32.gmra.mrb[0].mxu0 %v563
    %v631 = vpop.f32.mrb[0].mxu0
    %v632 = vadd.f32 0.0, %v631
    %v633 = vpop.f32.mrb[0].mxu0
    %634 = vdwg.mxu0
    %v635 = vadd.f32 %v472, %v632
    %v636 = vtanh.pop %v635
    %v637 = vmul.f32 %v636, %v553
    %v638 = vsub.f32 1.0, %v553
    %v639 = vmul.f32 %v162, %v638
    %v640 = vadd.f32 %v637, %v639
    %641 = vst.msk [vmem:[#allocation14] sm:$0xff] %vm165, %v640
    %v642 = vld [vmem:[#allocation2 + $0x8] sm:$0xff]
    %v643 = vld [vmem:[#allocation5 + $0x8] sm:$0xff]
    %v644 = vld [vmem:[#allocation7 + $0x8] sm:$0xff]
    %v646 = vsel %vm165, %v644, 0
    %648 = vmatprep.subr.mxu0 %v138
    %649 = vmatpush1.msra.mxu0 %v137
    %650 = vmatprep.subr.mxu0 %v141
    %651 = vmatpush1.msra.mxu0 %v140
    %652 = vmatprep.subr.mxu0 %v144
    %653 = vmatpush1.msra.mxu0 %v143
    %654 = vmatprep.subr.mxu0 %v147
    %655 = vmatpush1.msra.mxu0 %v146
    %656 = vmatprep.subr.mxu0 0.0
    %657 = vmatpush1.msra.mxu0 0.0
    %658 = vmatprep.subr.mxu0 0.0
    %659 = vmatpush1.msra.mxu0 0.0
    %660 = vmatprep.subr.mxu0 0.0
    %661 = vmatpush1.msra.mxu0 0.0
    %662 = vmatprep.subr.mxu0 0.0
    %663 = vmatpush1.msra.mxu0 0.0
    %664 = vmatprep.subr.mxu0 0.0
    %665 = vmatpush1.msra.mxu0 0.0
    %666 = vmatprep.subr.mxu0 0.0
    %667 = vmatpush1.msra.mxu0 0.0
    %668 = vmatprep.subr.mxu0 0.0
    %669 = vmatpush1.msra.mxu0 0.0
    %670 = vmatprep.subr.mxu0 0.0
    %671 = vmatpush1.msra.mxu0 0.0
    %672 = vmatprep.subr.mxu0 0.0
    %673 = vmatpush1.msra.mxu0 0.0
    %674 = vmatprep.subr.mxu0 0.0
    %675 = vmatpush1.msra.mxu0 0.0
    %676 = vmatprep.subr.mxu0 0.0
    %677 = vmatpush1.msra.mxu0 0.0
    %678 = vmatprep.subr.mxu0 0.0
    %679 = vmatpush1.msra.mxu0 0.0
    %680 = vmatprep.subr.mxu0 0.0
    %681 = vmatpush1.msra.mxu0 0.0
    %682 = vmatprep.subr.mxu0 0.0
    %683 = vmatpush1.msra.mxu0 0.0
    %684 = vmatprep.subr.mxu0 0.0
    %685 = vmatpush1.msra.mxu0 0.0
    %686 = vmatprep.subr.mxu0 0.0
    %687 = vmatpush1.msra.mxu0 0.0
    %688 = vmatprep.subr.mxu0 0.0
    %689 = vmatpush1.msra.mxu0 0.0
    %690 = vmatprep.subr.mxu0 0.0
    %691 = vmatpush1.msra.mxu0 0.0
    %692 = vmatprep.subr.mxu0 0.0
    %693 = vmatpush1.msra.mxu0 0.0
    %694 = vmatprep.subr.mxu0 0.0
    %695 = vmatpush1.msra.mxu0 0.0
    %696 = vmatprep.subr.mxu0 0.0
    %697 = vmatpush1.msra.mxu0 0.0
    %698 = vmatprep.subr.mxu0 0.0
    %699 = vmatpush1.msra.mxu0 0.0
    %700 = vmatprep.subr.mxu0 0.0
    %701 = vmatpush1.msra.mxu0 0.0
    %702 = vmatprep.subr.mxu0 0.0
    %703 = vmatpush1.msra.mxu0 0.0
    %704 = vmatprep.subr.mxu0 0.0
    %705 = vmatpush1.msra.mxu0 0.0
    %706 = vmatprep.subr.mxu0 0.0
    %707 = vmatpush1.msra.mxu0 0.0
    %708 = vmatprep.subr.mxu0 0.0
    %709 = vmatpush1.msra.mxu0 0.0
    %710 = vmatprep.subr.mxu0 0.0
    %711 = vmatpush1.msra.mxu0 0.0
    %712 = vmatprep.mubr.f32.mxu0 0.0
    %713 = vmatmul.mubr.f32.gmra.mrb[0].mxu0 %v646
    %v714 = vpop.f32.mrb[0].mxu0
    %v715 = vadd.f32 0.0, %v714
    %v716 = vpop.f32.mrb[0].mxu0
    %v717 = vadd.f32 0.0, %v716
    %718 = vdwg.mxu0
    %719 = vmatprep.subr.mxu0 0.0
    %720 = vmatpush1.msra.mxu0 %v139
    %721 = vmatprep.subr.mxu0 0.0
    %722 = vmatpush1.msra.mxu0 %v142
    %723 = vmatprep.subr.mxu0 0.0
    %724 = vmatpush1.msra.mxu0 %v145
    %725 = vmatprep.subr.mxu0 0.0
    %726 = vmatpush1.msra.mxu0 %v148
    %727 = vmatprep.subr.mxu0 0.0
    %728 = vmatpush1.msra.mxu0 0.0
    %729 = vmatprep.subr.mxu0 0.0
    %730 = vmatpush1.msra.mxu0 0.0
    %731 = vmatprep.subr.mxu0 0.0
    %732 = vmatpush1.msra.mxu0 0.0
    %733 = vmatprep.subr.mxu0 0.0
    %734 = vmatpush1.msra.mxu0 0.0
    %735 = vmatprep.subr.mxu0 0.0
    %736 = vmatpush1.msra.mxu0 0.0
    %737 = vmatprep.subr.mxu0 0.0
    %738 = vmatpush1.msra.mxu0 0.0
    %739 = vmatprep.subr.mxu0 0.0
    %740 = vmatpush1.msra.mxu0 0.0
    %741 = vmatprep.subr.mxu0 0.0
    %742 = vmatpush1.msra.mxu0 0.0
    %743 = vmatprep.subr.mxu0 0.0
    %744 = vmatpush1.msra.mxu0 0.0
    %745 = vmatprep.subr.mxu0 0.0
    %746 = vmatpush1.msra.mxu0 0.0
    %747 = vmatprep.subr.mxu0 0.0
    %748 = vmatpush1.msra.mxu0 0.0
    %749 = vmatprep.subr.mxu0 0.0
    %750 = vmatpush1.msra.mxu0 0.0
    %751 = vmatprep.subr.mxu0 0.0
    %752 = vmatpush1.msra.mxu0 0.0
    %753 = vmatprep.subr.mxu0 0.0
    %754 = vmatpush1.msra.mxu0 0.0
    %755 = vmatprep.subr.mxu0 0.0
    %756 = vmatpush1.msra.mxu0 0.0
    %757 = vmatprep.subr.mxu0 0.0
    %758 = vmatpush1.msra.mxu0 0.0
    %759 = vmatprep.subr.mxu0 0.0
    %760 = vmatpush1.msra.mxu0 0.0
    %761 = vmatprep.subr.mxu0 0.0
    %762 = vmatpush1.msra.mxu0 0.0
    %763 = vmatprep.subr.mxu0 0.0
    %764 = vmatpush1.msra.mxu0 0.0
    %765 = vmatprep.subr.mxu0 0.0
    %766 = vmatpush1.msra.mxu0 0.0
    %767 = vmatprep.subr.mxu0 0.0
    %768 = vmatpush1.msra.mxu0 0.0
    %769 = vmatprep.subr.mxu0 0.0
    %770 = vmatpush1.msra.mxu0 0.0
    %771 = vmatprep.subr.mxu0 0.0
    %772 = vmatpush1.msra.mxu0 0.0
    %773 = vmatprep.subr.mxu0 0.0
    %774 = vmatpush1.msra.mxu0 0.0
    %775 = vmatprep.subr.mxu0 0.0
    %776 = vmatpush1.msra.mxu0 0.0
    %777 = vmatprep.subr.mxu0 0.0
    %778 = vmatpush1.msra.mxu0 0.0
    %779 = vmatprep.subr.mxu0 0.0
    %780 = vmatpush1.msra.mxu0 0.0
    %781 = vmatprep.subr.mxu0 0.0
    %782 = vmatpush1.msra.mxu0 0.0
    %783 = vmatprep.mubr.f32.mxu0 0.0
    %784 = vmatmul.mubr.f32.gmra.mrb[0].mxu0 %v646
    %v785 = vpop.f32.mrb[0].mxu0
    %v786 = vadd.f32 0.0, %v785
    %v787 = vpop.f32.mrb[0].mxu0
    %788 = vdwg.mxu0
    %v790 = vsel %vm165, %v643, 0
    %792 = vmatprep.subr.mxu0 %v126
    %793 = vmatpush1.msra.mxu0 %v125
    %794 = vmatprep.subr.mxu0 %v129
    %795 = vmatpush1.msra.mxu0 %v128
    %796 = vmatprep.subr.mxu0 %v132
    %797 = vmatpush1.msra.mxu0 %v131
    %798 = vmatprep.subr.mxu0 %v135
    %799 = vmatpush1.msra.mxu0 %v134
    %800 = vmatprep.subr.mxu0 0.0
    %801 = vmatpush1.msra.mxu0 0.0
    %802 = vmatprep.subr.mxu0 0.0
    %803 = vmatpush1.msra.mxu0 0.0
    %804 = vmatprep.subr.mxu0 0.0
    %805 = vmatpush1.msra.mxu0 0.0
    %806 = vmatprep.subr.mxu0 0.0
    %807 = vmatpush1.msra.mxu0 0.0
    %808 = vmatprep.subr.mxu0 0.0
    %809 = vmatpush1.msra.mxu0 0.0
    %810 = vmatprep.subr.mxu0 0.0
    %811 = vmatpush1.msra.mxu0 0.0
    %812 = vmatprep.subr.mxu0 0.0
    %813 = vmatpush1.msra.mxu0 0.0
    %814 = vmatprep.subr.mxu0 0.0
    %815 = vmatpush1.msra.mxu0 0.0
    %816 = vmatprep.subr.mxu0 0.0
    %817 = vmatpush1.msra.mxu0 0.0
    %818 = vmatprep.subr.mxu0 0.0
    %819 = vmatpush1.msra.mxu0 0.0
    %820 = vmatprep.subr.mxu0 0.0
    %821 = vmatpush1.msra.mxu0 0.0
    %822 = vmatprep.subr.mxu0 0.0
    %823 = vmatpush1.msra.mxu0 0.0
    %824 = vmatprep.subr.mxu0 0.0
    %825 = vmatpush1.msra.mxu0 0.0
    %826 = vmatprep.subr.mxu0 0.0
    %827 = vmatpush1.msra.mxu0 0.0
    %828 = vmatprep.subr.mxu0 0.0
    %829 = vmatpush1.msra.mxu0 0.0
    %830 = vmatprep.subr.mxu0 0.0
    %831 = vmatpush1.msra.mxu0 0.0
    %832 = vmatprep.subr.mxu0 0.0
    %833 = vmatpush1.msra.mxu0 0.0
    %834 = vmatprep.subr.mxu0 0.0
    %835 = vmatpush1.msra.mxu0 0.0
    %836 = vmatprep.subr.mxu0 0.0
    %837 = vmatpush1.msra.mxu0 0.0
    %838 = vmatprep.subr.mxu0 0.0
    %839 = vmatpush1.msra.mxu0 0.0
    %840 = vmatprep.subr.mxu0 0.0
    %841 = vmatpush1.msra.mxu0 0.0
    %842 = vmatprep.subr.mxu0 0.0
    %843 = vmatpush1.msra.mxu0 0.0
    %844 = vmatprep.subr.mxu0 0.0
    %845 = vmatpush1.msra.mxu0 0.0
    %846 = vmatprep.subr.mxu0 0.0
    %847 = vmatpush1.msra.mxu0 0.0
    %848 = vmatprep.subr.mxu0 0.0
    %849 = vmatpush1.msra.mxu0 0.0
    %850 = vmatprep.subr.mxu0 0.0
    %851 = vmatpush1.msra.mxu0 0.0
    %852 = vmatprep.subr.mxu0 0.0
    %853 = vmatpush1.msra.mxu0 0.0
    %854 = vmatprep.subr.mxu0 0.0
    %855 = vmatpush1.msra.mxu0 0.0
    %856 = vmatprep.mubr.f32.mxu0 0.0
    %857 = vmatmul.mubr.f32.gmra.mrb[0].mxu0 %v790
    %v858 = vpop.f32.mrb[0].mxu0
    %v859 = vadd.f32 %v715, %v858
    %v860 = vpop.f32.mrb[0].mxu0
    %v861 = vadd.f32 %v717, %v860
    %862 = vdwg.mxu0
    %863 = vmatprep.subr.mxu0 0.0
    %864 = vmatpush1.msra.mxu0 %v127
    %865 = vmatprep.subr.mxu0 0.0
    %866 = vmatpush1.msra.mxu0 %v130
    %867 = vmatprep.subr.mxu0 0.0
    %868 = vmatpush1.msra.mxu0 %v133
    %869 = vmatprep.subr.mxu0 0.0
    %870 = vmatpush1.msra.mxu0 %v136
    %871 = vmatprep.subr.mxu0 0.0
    %872 = vmatpush1.msra.mxu0 0.0
    %873 = vmatprep.subr.mxu0 0.0
    %874 = vmatpush1.msra.mxu0 0.0
    %875 = vmatprep.subr.mxu0 0.0
    %876 = vmatpush1.msra.mxu0 0.0
    %877 = vmatprep.subr.mxu0 0.0
    %878 = vmatpush1.msra.mxu0 0.0
    %879 = vmatprep.subr.mxu0 0.0
    %880 = vmatpush1.msra.mxu0 0.0
    %881 = vmatprep.subr.mxu0 0.0
    %882 = vmatpush1.msra.mxu0 0.0
    %883 = vmatprep.subr.mxu0 0.0
    %884 = vmatpush1.msra.mxu0 0.0
    %885 = vmatprep.subr.mxu0 0.0
    %886 = vmatpush1.msra.mxu0 0.0
    %887 = vmatprep.subr.mxu0 0.0
    %888 = vmatpush1.msra.mxu0 0.0
    %889 = vmatprep.subr.mxu0 0.0
    %890 = vmatpush1.msra.mxu0 0.0
    %891 = vmatprep.subr.mxu0 0.0
    %892 = vmatpush1.msra.mxu0 0.0
    %893 = vmatprep.subr.mxu0 0.0
    %894 = vmatpush1.msra.mxu0 0.0
    %895 = vmatprep.subr.mxu0 0.0
    %896 = vmatpush1.msra.mxu0 0.0
    %897 = vmatprep.subr.mxu0 0.0
    %898 = vmatpush1.msra.mxu0 0.0
    %899 = vmatprep.subr.mxu0 0.0
    %900 = vmatpush1.msra.mxu0 0.0
    %901 = vmatprep.subr.mxu0 0.0
    %902 = vmatpush1.msra.mxu0 0.0
    %903 = vmatprep.subr.mxu0 0.0
    %904 = vmatpush1.msra.mxu0 0.0
    %905 = vmatprep.subr.mxu0 0.0
    %906 = vmatpush1.msra.mxu0 0.0
    %907 = vmatprep.subr.mxu0 0.0
    %908 = vmatpush1.msra.mxu0 0.0
    %909 = vmatprep.subr.mxu0 0.0
    %910 = vmatpush1.msra.mxu0 0.0
    %911 = vmatprep.subr.mxu0 0.0
    %912 = vmatpush1.msra.mxu0 0.0
    %913 = vmatprep.subr.mxu0 0.0
    %914 = vmatpush1.msra.mxu0 0.0
    %915 = vmatprep.subr.mxu0 0.0
    %916 = vmatpush1.msra.mxu0 0.0
    %917 = vmatprep.subr.mxu0 0.0
    %918 = vmatpush1.msra.mxu0 0.0
    %919 = vmatprep.subr.mxu0 0.0
    %920 = vmatpush1.msra.mxu0 0.0
    %921 = vmatprep.subr.mxu0 0.0
    %922 = vmatpush1.msra.mxu0 0.0
    %923 = vmatprep.subr.mxu0 0.0
    %924 = vmatpush1.msra.mxu0 0.0
    %925 = vmatprep.subr.mxu0 0.0
    %926 = vmatpush1.msra.mxu0 0.0
    %927 = vmatprep.mubr.f32.mxu0 0.0
    %928 = vmatmul.mubr.f32.gmra.mrb[0].mxu0 %v790
    %v929 = vpop.f32.mrb[0].mxu0
    %v930 = vadd.f32 %v786, %v929
    %v931 = vpop.f32.mrb[0].mxu0
    %932 = vdwg.mxu0
    %v933 = vadd.f32 %v859, %v458
    %v934 = vadd.f32 %v861, %v462
    %v935 = vadd.f32 %v930, %v466
    %v937 = vsel %vm165, %v642, 0
    %939 = vmatprep.subr.mxu0 %v150
    %940 = vmatpush1.msra.mxu0 %v149
    %941 = vmatprep.subr.mxu0 %v152
    %942 = vmatpush1.msra.mxu0 %v151
    %943 = vmatprep.subr.mxu0 %v154
    %944 = vmatpush1.msra.mxu0 %v153
    %945 = vmatprep.subr.mxu0 %v156
    %946 = vmatpush1.msra.mxu0 %v155
    %947 = vmatprep.subr.mxu0 0.0
    %948 = vmatpush1.msra.mxu0 0.0
    %949 = vmatprep.subr.mxu0 0.0
    %950 = vmatpush1.msra.mxu0 0.0
    %951 = vmatprep.subr.mxu0 0.0
    %952 = vmatpush1.msra.mxu0 0.0
    %953 = vmatprep.subr.mxu0 0.0
    %954 = vmatpush1.msra.mxu0 0.0
    %955 = vmatprep.subr.mxu0 0.0
    %956 = vmatpush1.msra.mxu0 0.0
    %957 = vmatprep.subr.mxu0 0.0
    %958 = vmatpush1.msra.mxu0 0.0
    %959 = vmatprep.subr.mxu0 0.0
    %960 = vmatpush1.msra.mxu0 0.0
    %961 = vmatprep.subr.mxu0 0.0
    %962 = vmatpush1.msra.mxu0 0.0
    %963 = vmatprep.subr.mxu0 0.0
    %964 = vmatpush1.msra.mxu0 0.0
    %965 = vmatprep.subr.mxu0 0.0
    %966 = vmatpush1.msra.mxu0 0.0
    %967 = vmatprep.subr.mxu0 0.0
    %968 = vmatpush1.msra.mxu0 0.0
    %969 = vmatprep.subr.mxu0 0.0
    %970 = vmatpush1.msra.mxu0 0.0
    %971 = vmatprep.subr.mxu0 0.0
    %972 = vmatpush1.msra.mxu0 0.0
    %973 = vmatprep.subr.mxu0 0.0
    %974 = vmatpush1.msra.mxu0 0.0
    %975 = vmatprep.subr.mxu0 0.0
    %976 = vmatpush1.msra.mxu0 0.0
    %977 = vmatprep.subr.mxu0 0.0
    %978 = vmatpush1.msra.mxu0 0.0
    %979 = vmatprep.subr.mxu0 0.0
    %980 = vmatpush1.msra.mxu0 0.0
    %981 = vmatprep.subr.mxu0 0.0
    %982 = vmatpush1.msra.mxu0 0.0
    %983 = vmatprep.subr.mxu0 0.0
    %984 = vmatpush1.msra.mxu0 0.0
    %985 = vmatprep.subr.mxu0 0.0
    %986 = vmatpush1.msra.mxu0 0.0
    %987 = vmatprep.subr.mxu0 0.0
    %988 = vmatpush1.msra.mxu0 0.0
    %989 = vmatprep.subr.mxu0 0.0
    %990 = vmatpush1.msra.mxu0 0.0
    %991 = vmatprep.subr.mxu0 0.0
    %992 = vmatpush1.msra.mxu0 0.0
    %993 = vmatprep.subr.mxu0 0.0
    %994 = vmatpush1.msra.mxu0 0.0
    %995 = vmatprep.subr.mxu0 0.0
    %996 = vmatpush1.msra.mxu0 0.0
    %997 = vmatprep.subr.mxu0 0.0
    %998 = vmatpush1.msra.mxu0 0.0
    %999 = vmatprep.subr.mxu0 0.0
    %1000 = vmatpush1.msra.mxu0 0.0
    %1001 = vmatprep.subr.mxu0 0.0
    %1002 = vmatpush1.msra.mxu0 0.0
    %1003 = vmatprep.mubr.f32.mxu0 0.0
    %1004 = vmatmul.mubr.f32.gmra.mrb[0].mxu0 %v937
    %v1005 = vpop.f32.mrb[0].mxu0
    %v1006 = vadd.f32 0.0, %v1005
    %v1007 = vpop.f32.mrb[0].mxu0
    %v1008 = vadd.f32 0.0, %v1007
    %1009 = vdwg.mxu0
    %v1010 = vadd.f32 %v933, %v1006
    %v1011 = vxor.u32 %v1010, 2147483648
    %v1012 = vmul.f32 %v1011, 1.442695
    %v1013 = vpow.pop %v1012
    %v1014 = vadd.f32 %v1013, 1.0
    %v1015 = vrcp.pop %v1014
    %v1016 = vmul.f32 1.0, %v1015
    %v1017 = vadd.f32 %v934, %v1008
    %v1018 = vxor.u32 %v1017, 2147483648
    %v1019 = vmul.f32 %v1018, 1.442695
    %v1020 = vpow.pop %v1019
    %v1021 = vadd.f32 %v1020, 1.0
    %v1022 = vrcp.pop %v1021
    %v1023 = vmul.f32 1.0, %v1022
    %v1024 = vmul.f32 %v642, %v1023
    %v1026 = vsel %vm165, %v1024, 0
    %1028 = vmatprep.subr.mxu0 0.0
    %1029 = vmatpush1.msra.mxu0 %v157
    %1030 = vmatprep.subr.mxu0 0.0
    %1031 = vmatpush1.msra.mxu0 %v158
    %1032 = vmatprep.subr.mxu0 0.0
    %1033 = vmatpush1.msra.mxu0 %v159
    %1034 = vmatprep.subr.mxu0 0.0
    %1035 = vmatpush1.msra.mxu0 %v160
    %1036 = vmatprep.subr.mxu0 0.0
    %1037 = vmatpush1.msra.mxu0 0.0
    %1038 = vmatprep.subr.mxu0 0.0
    %1039 = vmatpush1.msra.mxu0 0.0
    %1040 = vmatprep.subr.mxu0 0.0
    %1041 = vmatpush1.msra.mxu0 0.0
    %1042 = vmatprep.subr.mxu0 0.0
    %1043 = vmatpush1.msra.mxu0 0.0
    %1044 = vmatprep.subr.mxu0 0.0
    %1045 = vmatpush1.msra.mxu0 0.0
    %1046 = vmatprep.subr.mxu0 0.0
    %1047 = vmatpush1.msra.mxu0 0.0
    %1048 = vmatprep.subr.mxu0 0.0
    %1049 = vmatpush1.msra.mxu0 0.0
    %1050 = vmatprep.subr.mxu0 0.0
    %1051 = vmatpush1.msra.mxu0 0.0
    %1052 = vmatprep.subr.mxu0 0.0
    %1053 = vmatpush1.msra.mxu0 0.0
    %1054 = vmatprep.subr.mxu0 0.0
    %1055 = vmatpush1.msra.mxu0 0.0
    %1056 = vmatprep.subr.mxu0 0.0
    %1057 = vmatpush1.msra.mxu0 0.0
    %1058 = vmatprep.subr.mxu0 0.0
    %1059 = vmatpush1.msra.mxu0 0.0
    %1060 = vmatprep.subr.mxu0 0.0
    %1061 = vmatpush1.msra.mxu0 0.0
    %1062 = vmatprep.subr.mxu0 0.0
    %1063 = vmatpush1.msra.mxu0 0.0
    %1064 = vmatprep.subr.mxu0 0.0
    %1065 = vmatpush1.msra.mxu0 0.0
    %1066 = vmatprep.subr.mxu0 0.0
    %1067 = vmatpush1.msra.mxu0 0.0
    %1068 = vmatprep.subr.mxu0 0.0
    %1069 = vmatpush1.msra.mxu0 0.0
    %1070 = vmatprep.subr.mxu0 0.0
    %1071 = vmatpush1.msra.mxu0 0.0
    %1072 = vmatprep.subr.mxu0 0.0
    %1073 = vmatpush1.msra.mxu0 0.0
    %1074 = vmatprep.subr.mxu0 0.0
    %1075 = vmatpush1.msra.mxu0 0.0
    %1076 = vmatprep.subr.mxu0 0.0
    %1077 = vmatpush1.msra.mxu0 0.0
    %1078 = vmatprep.subr.mxu0 0.0
    %1079 = vmatpush1.msra.mxu0 0.0
    %1080 = vmatprep.subr.mxu0 0.0
    %1081 = vmatpush1.msra.mxu0 0.0
    %1082 = vmatprep.subr.mxu0 0.0
    %1083 = vmatpush1.msra.mxu0 0.0
    %1084 = vmatprep.subr.mxu0 0.0
    %1085 = vmatpush1.msra.mxu0 0.0
    %1086 = vmatprep.subr.mxu0 0.0
    %1087 = vmatpush1.msra.mxu0 0.0
    %1088 = vmatprep.subr.mxu0 0.0
    %1089 = vmatpush1.msra.mxu0 0.0
    %1090 = vmatprep.subr.mxu0 0.0
    %1091 = vmatpush1.msra.mxu0 0.0
    %1092 = vmatprep.mubr.f32.mxu0 0.0
    %1093 = vmatmul.mubr.f32.gmra.mrb[0].mxu0 %v1026
    %v1094 = vpop.f32.mrb[0].mxu0
    %v1095 = vadd.f32 0.0, %v1094
    %v1096 = vpop.f32.mrb[0].mxu0
    %1097 = vdwg.mxu0
    %v1098 = vadd.f32 %v935, %v1095
    %v1099 = vtanh.pop %v1098
    %v1100 = vmul.f32 %v1099, %v1016
    %v1101 = vsub.f32 1.0, %v1016
    %v1102 = vmul.f32 %v642, %v1101
    %v1103 = vadd.f32 %v1100, %v1102
    %1104 = vst.msk [vmem:[#allocation14 + $0x8] sm:$0xff] %vm165, %v1103
    // Predicated region
    $region62: #{tpu_custom_call.1} parent=1 // pred_check
      _
    $region63: #{tpu_custom_call.1} parent=1 // pred_check_branch
      %1106 = sbr.rel (0) target = $region65
    $region64: #{tpu_custom_call.1} parent=1 // pred_region
      %s1108 = ssub.s32 256, 256
      %1109 = vsyncadd [#allocation4], %s1108
      %s1110 = sshll.u32 [#allocation14], 4
      %s1111 = int_to_ptr.vmem [resolvable:$true] %s1110
      %1116 = dma.vmem_to_hbm [thread:$0]  %s1111, 256, %s8, [#allocation4], 128, 128, 8
    $region65: #{tpu_custom_call.1} parent=1 // pred_fallthru
      _
    // Predicated region
    $region66: #{tpu_custom_call.1} parent=1 // pred_check
      _
    $region67: #{tpu_custom_call.1} parent=1 // pred_check_branch
      %1118 = sbr.rel (0) target = $region69
    $region68: #{tpu_custom_call.1} parent=1 // pred_region
      %1119 = dma.done [#allocation4], 256
    $region69: #{tpu_custom_call.1} parent=1 // pred_fallthru
      _
    %1120 = vsyncpa [#allocation3], 1
    %1121 = vsyncpa [#allocation6], 1
    %1122 = vsyncpa [#allocation9], 1
    %1123 = vsyncpa [#allocation12], 1
    %1124 = vsyncpa [#allocation4], 1

// kernel: tpu_custom_call.1
$region0: #{tpu_custom_call.1}
  #allocation0 [shape = 'u32[]', space=smem, size = 0x4, offset = 0x4, fixed_abs, tag = 'smem constant byte address 0x4 - core index']
  #allocation1 [shape = 'u32[144,128]{1,0:T(1,128)}', space=vmem, size = 0x12000, scoped, tag = 'internal scratch']
  %s0 = inlined_call_operand.hbm [shape: f32[16,32], index: 0, kind: input, shape index: {}]
  %s1 = inlined_call_operand.hbm [shape: f32[16,32], index: 1, kind: input, shape index: {}]
  %s2 = inlined_call_operand.hbm [shape: f32[16,32], index: 2, kind: input, shape index: {}]
  %s3 = inlined_call_operand.hbm [shape: f32[32,384], index: 3, kind: input, shape index: {}]
  %s4 = inlined_call_operand.hbm [shape: f32[32,384], index: 4, kind: input, shape index: {}]
  %s5 = inlined_call_operand.hbm [shape: f32[32,256], index: 5, kind: input, shape index: {}]
  %s6 = inlined_call_operand.hbm [shape: f32[32,128], index: 6, kind: input, shape index: {}]
  %s7 = inlined_call_operand.vmem [shape: f32[1,384], index: 7, kind: input, shape index: {}]
  %s8 = inlined_call_operand.hbm [shape: f32[16,32], index: 8, kind: output, shape index: {}]
  %s9 = sld [smem:[#allocation0]]
  $region70: #{tpu_custom_call.1} parent=0
    _
  %s11 = ssub.s32 1, %s9
  %s12 = scalar_select 0, %s11, %s9
  $region1: #{tpu_custom_call.1} parent=0
    #allocation2 [shape = 'u8[8192]{0}', space=vmem, size = 0x2000, scoped, tag = 'input window, operand 0, single buffered']
    #allocation3 [shape = 's32[1]{0}', space=sflag, size = 0x4, scoped, tag = 'scoped memory for tpu_custom_call.1']
    #allocation4 [shape = 's32[1]{0}', space=sflag, size = 0x4, scoped, tag = 'scoped memory for tpu_custom_call.1']
    #allocation5 [shape = 'u8[8192]{0}', space=vmem, size = 0x2000, scoped, tag = 'input window, operand 1, single buffered']
    #allocation6 [shape = 's32[1]{0}', space=sflag, size = 0x4, scoped, tag = 'scoped memory for tpu_custom_call.1']
    #allocation7 [shape = 'u8[8192]{0}', space=vmem, size = 0x2000, scoped, tag = 'input window, operand 2, single buffered']
    #allocation8 [shape = 'u8[49152]{0}', space=vmem, size = 0xc000, scoped, tag = 'input window, operand 3, single buffered']
    #allocation9 [shape = 's32[1]{0}', space=sflag, size = 0x4, scoped, tag = 'scoped memory for tpu_custom_call.1']
    #allocation10 [shape = 'u8[49152]{0}', space=vmem, size = 0xc000, scoped, tag = 'input window, operand 4, single buffered']
    #allocation11 [shape = 'u8[32768]{0}', space=vmem, size = 0x8000, scoped, tag = 'input window, operand 5, single buffered']
    #allocation12 [shape = 's32[1]{0}', space=sflag, size = 0x4, scoped, tag = 'scoped memory for tpu_custom_call.1']
    #allocation13 [shape = 'u8[16384]{0}', space=vmem, size = 0x4000, scoped, tag = 'input window, operand 6, single buffered']
    #allocation14 [shape = 'u8[8192]{0}', space=vmem, size = 0x2000, scoped, tag = 'output window, operand 0, single buffered']
    %13 = vsyncpa [#allocation3], 0
    %14 = vsyncpa [#allocation6], 0
    %15 = vsyncpa [#allocation9], 0
    %16 = vsyncpa [#allocation12], 0
    %17 = vsyncpa [#allocation4], 0
    // Predicated region
    $region2: #{tpu_custom_call.1} parent=1 // pred_check
      _
    $region3: #{tpu_custom_call.1} parent=1 // pred_check_branch
      %19 = sbr.rel (0) target = $region5
    $region4: #{tpu_custom_call.1} parent=1 // pred_region
      %s21 = ssub.s32 256, 256
      %22 = vsyncadd [#allocation3], %s21
      %s23 = sshll.u32 [#allocation2], 4
      %s24 = int_to_ptr.vmem [resolvable:$true] %s23
      %29 = dma.hbm_to_vmem [thread:$0]  %s0, 256, %s24, [#allocation3], 128, 128, 8
    $region5: #{tpu_custom_call.1} parent=1 // pred_fallthru
      _
    // Predicated region
    $region6: #{tpu_custom_call.1} parent=1 // pred_check
      _
    $region7: #{tpu_custom_call.1} parent=1 // pred_check_branch
      %31 = sbr.rel (0) target = $region9
    $region8: #{tpu_custom_call.1} parent=1 // pred_region
      %s33 = ssub.s32 256, 256
      %34 = vsyncadd [#allocation6], %s33
      %s35 = sshll.u32 [#allocation5], 4
      %s36 = int_to_ptr.vmem [resolvable:$true] %s35
      %41 = dma.hbm_to_vmem [thread:$0]  %s1, 256, %s36, [#allocation6], 128, 128, 8
    $region9: #{tpu_custom_call.1} parent=1 // pred_fallthru
      _
    // Predicated region
    $region10: #{tpu_custom_call.1} parent=1 // pred_check
      _
    $region11: #{tpu_custom_call.1} parent=1 // pred_check_branch
      %43 = sbr.rel (0) target = $region13
    $region12: #{tpu_custom_call.1} parent=1 // pred_region
      %s45 = ssub.s32 256, 256
      %46 = vsyncadd [#allocation6], %s45
      %s47 = sshll.u32 [#allocation7], 4
      %s48 = int_to_ptr.vmem [resolvable:$true] %s47
      %53 = dma.hbm_to_vmem [thread:$0]  %s2, 256, %s48, [#allocation6], 128, 128, 8
    $region13: #{tpu_custom_call.1} parent=1 // pred_fallthru
      _
    // Predicated region
    $region14: #{tpu_custom_call.1} parent=1 // pred_check
      _
    $region15: #{tpu_custom_call.1} parent=1 // pred_check_branch
      %55 = sbr.rel (0) target = $region17
    $region16: #{tpu_custom_call.1} parent=1 // pred_region
      %s57 = ssub.s32 1536, 1536
      %58 = vsyncadd [#allocation9], %s57
      %s59 = sshll.u32 [#allocation8], 4
      %s60 = int_to_ptr.vmem [resolvable:$true] %s59
      %65 = dma.hbm_to_vmem [thread:$0]  %s3, 1536, %s60, [#allocation9], 384, 384, 24
    $region17: #{tpu_custom_call.1} parent=1 // pred_fallthru
      _
    // Predicated region
    $region18: #{tpu_custom_call.1} parent=1 // pred_check
      _
    $region19: #{tpu_custom_call.1} parent=1 // pred_check_branch
      %67 = sbr.rel (0) target = $region21
    $region20: #{tpu_custom_call.1} parent=1 // pred_region
      %s69 = ssub.s32 1536, 1536
      %70 = vsyncadd [#allocation9], %s69
      %s71 = sshll.u32 [#allocation10], 4
      %s72 = int_to_ptr.vmem [resolvable:$true] %s71
      %77 = dma.hbm_to_vmem [thread:$0]  %s4, 1536, %s72, [#allocation9], 384, 384, 24
    $region21: #{tpu_custom_call.1} parent=1 // pred_fallthru
      _
    // Predicated region
    $region22: #{tpu_custom_call.1} parent=1 // pred_check
      _
    $region23: #{tpu_custom_call.1} parent=1 // pred_check_branch
      %79 = sbr.rel (0) target = $region25
    $region24: #{tpu_custom_call.1} parent=1 // pred_region
      %s81 = ssub.s32 1024, 1024
      %82 = vsyncadd [#allocation12], %s81
      %s83 = sshll.u32 [#allocation11], 4
      %s84 = int_to_ptr.vmem [resolvable:$true] %s83
      %89 = dma.hbm_to_vmem [thread:$0]  %s5, 1024, %s84, [#allocation12], 256, 256, 16
    $region25: #{tpu_custom_call.1} parent=1 // pred_fallthru
      _
    // Predicated region
    $region26: #{tpu_custom_call.1} parent=1 // pred_check
      _
    $region27: #{tpu_custom_call.1} parent=1 // pred_check_branch
      %91 = sbr.rel (0) target = $region29
    $region28: #{tpu_custom_call.1} parent=1 // pred_region
      %s93 = ssub.s32 512, 512
      %94 = vsyncadd [#allocation12], %s93
      %s95 = sshll.u32 [#allocation13], 4
      %s96 = int_to_ptr.vmem [resolvable:$true] %s95
      %101 = dma.hbm_to_vmem [thread:$0]  %s6, 512, %s96, [#allocation12], 128, 128, 8
    $region29: #{tpu_custom_call.1} parent=1 // pred_fallthru
      _
    // Predicated region
    $region30: #{tpu_custom_call.1} parent=1 // pred_check
      _
    $region31: #{tpu_custom_call.1} parent=1 // pred_check_branch
      %103 = sbr.rel (0) target = $region33
    $region32: #{tpu_custom_call.1} parent=1 // pred_region
      _
    $region33: #{tpu_custom_call.1} parent=1 // pred_fallthru
      _
    // Predicated region
    $region34: #{tpu_custom_call.1} parent=1 // pred_check
      _
    $region35: #{tpu_custom_call.1} parent=1 // pred_check_branch
      %105 = sbr.rel (0) target = $region37
    $region36: #{tpu_custom_call.1} parent=1 // pred_region
      %106 = dma.done [#allocation3], 256
    $region37: #{tpu_custom_call.1} parent=1 // pred_fallthru
      _
    // Predicated region
    $region38: #{tpu_custom_call.1} parent=1 // pred_check
      _
    $region39: #{tpu_custom_call.1} parent=1 // pred_check_branch
      %108 = sbr.rel (0) target = $region41
    $region40: #{tpu_custom_call.1} parent=1 // pred_region
      %109 = dma.done [#allocation6], 256
    $region41: #{tpu_custom_call.1} parent=1 // pred_fallthru
      _
    // Predicated region
    $region42: #{tpu_custom_call.1} parent=1 // pred_check
      _
    $region43: #{tpu_custom_call.1} parent=1 // pred_check_branch
      %111 = sbr.rel (0) target = $region45
    $region44: #{tpu_custom_call.1} parent=1 // pred_region
      %112 = dma.done [#allocation6], 256
    $region45: #{tpu_custom_call.1} parent=1 // pred_fallthru
      _
    // Predicated region
    $region46: #{tpu_custom_call.1} parent=1 // pred_check
      _
    $region47: #{tpu_custom_call.1} parent=1 // pred_check_branch
      %114 = sbr.rel (0) target = $region49
    $region48: #{tpu_custom_call.1} parent=1 // pred_region
      %115 = dma.done [#allocation9], 1536
    $region49: #{tpu_custom_call.1} parent=1 // pred_fallthru
      _
    // Predicated region
    $region50: #{tpu_custom_call.1} parent=1 // pred_check
      _
    $region51: #{tpu_custom_call.1} parent=1 // pred_check_branch
      %117 = sbr.rel (0) target = $region53
    $region52: #{tpu_custom_call.1} parent=1 // pred_region
      %118 = dma.done [#allocation9], 1536
    $region53: #{tpu_custom_call.1} parent=1 // pred_fallthru
      _
    // Predicated region
    $region54: #{tpu_custom_call.1} parent=1 // pred_check
      _
    $region55: #{tpu_custom_call.1} parent=1 // pred_check_branch
      %120 = sbr.rel (0) target = $region57
    $region56: #{tpu_custom_call.1} parent=1 // pred_region
      %121 = dma.done [#allocation12], 1024
    $region57: #{tpu_custom_call.1} parent=1 // pred_fallthru
      _
    // Predicated region
    $region58: #{tpu_custom_call.1} parent=1 // pred_check
      _
    $region59: #{tpu_custom_call.1} parent=1 // pred_check_branch
      %123 = sbr.rel (0) target = $region61
    $region60: #{tpu_custom_call.1} parent=1 // pred_region
      %124 = dma.done [#allocation12], 512
    $region61: #{tpu_custom_call.1} parent=1 // pred_fallthru
      _
    %v125 = vld [vmem:[#allocation8] sm:$0xff]
    %v126 = vld [vmem:[#allocation8 + $0x8] sm:$0xff]
    %v127 = vld [vmem:[#allocation8 + $0x10] sm:$0xff]
    %v128 = vld [vmem:[#allocation8 + $0x18] sm:$0xff]
    %v129 = vld [vmem:[#allocation8 + $0x20] sm:$0xff]
    %v130 = vld [vmem:[#allocation8 + $0x28] sm:$0xff]
    %v131 = vld [vmem:[#allocation8 + $0x30] sm:$0xff]
    %v132 = vld [vmem:[#allocation8 + $0x38] sm:$0xff]
    %v133 = vld [vmem:[#allocation8 + $0x40] sm:$0xff]
    %v134 = vld [vmem:[#allocation8 + $0x48] sm:$0xff]
    %v135 = vld [vmem:[#allocation8 + $0x50] sm:$0xff]
    %v136 = vld [vmem:[#allocation8 + $0x58] sm:$0xff]
    %v137 = vld [vmem:[#allocation10] sm:$0xff]
    %v138 = vld [vmem:[#allocation10 + $0x8] sm:$0xff]
    %v139 = vld [vmem:[#allocation10 + $0x10] sm:$0xff]
    %v140 = vld [vmem:[#allocation10 + $0x18] sm:$0xff]
    %v141 = vld [vmem:[#allocation10 + $0x20] sm:$0xff]
    %v142 = vld [vmem:[#allocation10 + $0x28] sm:$0xff]
    %v143 = vld [vmem:[#allocation10 + $0x30] sm:$0xff]
    %v144 = vld [vmem:[#allocation10 + $0x38] sm:$0xff]
    %v145 = vld [vmem:[#allocation10 + $0x40] sm:$0xff]
    %v146 = vld [vmem:[#allocation10 + $0x48] sm:$0xff]
    %v147 = vld [vmem:[#allocation10 + $0x50] sm:$0xff]
    %v148 = vld [vmem:[#allocation10 + $0x58] sm:$0xff]
    %v149 = vld [vmem:[#allocation11] sm:$0xff]
    %v150 = vld [vmem:[#allocation11 + $0x8] sm:$0xff]
    %v151 = vld [vmem:[#allocation11 + $0x10] sm:$0xff]
    %v152 = vld [vmem:[#allocation11 + $0x18] sm:$0xff]
    %v153 = vld [vmem:[#allocation11 + $0x20] sm:$0xff]
    %v154 = vld [vmem:[#allocation11 + $0x28] sm:$0xff]
    %v155 = vld [vmem:[#allocation11 + $0x30] sm:$0xff]
    %v156 = vld [vmem:[#allocation11 + $0x38] sm:$0xff]
    %v157 = vld [vmem:[#allocation13] sm:$0xff]
    %v158 = vld [vmem:[#allocation13 + $0x8] sm:$0xff]
    %v159 = vld [vmem:[#allocation13 + $0x10] sm:$0xff]
    %v160 = vld [vmem:[#allocation13 + $0x18] sm:$0xff]
    %v161 = vld [vmem:[%s7] sm:$0x7]
    %v162 = vld [vmem:[#allocation2] sm:$0xff]
    %v163 = vld [vmem:[#allocation5] sm:$0xff]
    %v164 = vld [vmem:[#allocation7] sm:$0xff]
    %vm165 = vcmask 261120
    %v167 = vsel %vm165, %v164, 0
    %169 = vmatprep.subr.mxu0 %v138
    %170 = vmatpush1.msra.mxu0 %v137
    %171 = vmatprep.subr.mxu0 %v141
    %172 = vmatpush1.msra.mxu0 %v140
    %173 = vmatprep.subr.mxu0 %v144
    %174 = vmatpush1.msra.mxu0 %v143
    %175 = vmatprep.subr.mxu0 %v147
    %176 = vmatpush1.msra.mxu0 %v146
    %177 = vmatprep.subr.mxu0 0.0
    %178 = vmatpush1.msra.mxu0 0.0
    %179 = vmatprep.subr.mxu0 0.0
    %180 = vmatpush1.msra.mxu0 0.0
    %181 = vmatprep.subr.mxu0 0.0
    %182 = vmatpush1.msra.mxu0 0.0
    %183 = vmatprep.subr.mxu0 0.0
    %184 = vmatpush1.msra.mxu0 0.0
    %185 = vmatprep.subr.mxu0 0.0
    %186 = vmatpush1.msra.mxu0 0.0
    %187 = vmatprep.subr.mxu0 0.0
    %188 = vmatpush1.msra.mxu0 0.0
    %189 = vmatprep.subr.mxu0 0.0
    %190 = vmatpush1.msra.mxu0 0.0
    %191 = vmatprep.subr.mxu0 0.0
    %192 = vmatpush1.msra.mxu0 0.0
    %193 = vmatprep.subr.mxu0 0.0
    %194 = vmatpush1.msra.mxu0 0.0
    %195 = vmatprep.subr.mxu0 0.0
    %196 = vmatpush1.msra.mxu0 0.0
    %197 = vmatprep.subr.mxu0 0.0
    %198 = vmatpush1.msra.mxu0 0.0
    %199 = vmatprep.subr.mxu0 0.0
    %200 = vmatpush1.msra.mxu0 0.0
    %201 = vmatprep.subr.mxu0 0.0
    %202 = vmatpush1.msra.mxu0 0.0
    %203 = vmatprep.subr.mxu0 0.0
    %204 = vmatpush1.msra.mxu0 0.0
    %205 = vmatprep.subr.mxu0 0.0
    %206 = vmatpush1.msra.mxu0 0.0
    %207 = vmatprep.subr.mxu0 0.0
    %208 = vmatpush1.msra.mxu0 0.0
    %209 = vmatprep.subr.mxu0 0.0
    %210 = vmatpush1.msra.mxu0 0.0
    %211 = vmatprep.subr.mxu0 0.0
    %212 = vmatpush1.msra.mxu0 0.0
    %213 = vmatprep.subr.mxu0 0.0
    %214 = vmatpush1.msra.mxu0 0.0
    %215 = vmatprep.subr.mxu0 0.0
    %216 = vmatpush1.msra.mxu0 0.0
    %217 = vmatprep.subr.mxu0 0.0
    %218 = vmatpush1.msra.mxu0 0.0
    %219 = vmatprep.subr.mxu0 0.0
    %220 = vmatpush1.msra.mxu0 0.0
    %221 = vmatprep.subr.mxu0 0.0
    %222 = vmatpush1.msra.mxu0 0.0
    %223 = vmatprep.subr.mxu0 0.0
    %224 = vmatpush1.msra.mxu0 0.0
    %225 = vmatprep.subr.mxu0 0.0
    %226 = vmatpush1.msra.mxu0 0.0
    %227 = vmatprep.subr.mxu0 0.0
    %228 = vmatpush1.msra.mxu0 0.0
    %229 = vmatprep.subr.mxu0 0.0
    %230 = vmatpush1.msra.mxu0 0.0
    %231 = vmatprep.subr.mxu0 0.0
    %232 = vmatpush1.msra.mxu0 0.0
    %233 = vmatprep.mubr.f32.mxu0 0.0
    %234 = vmatmul.mubr.f32.gmra.mrb[0].mxu0 %v167
    %v235 = vpop.f32.mrb[0].mxu0
    %v236 = vadd.f32 0.0, %v235
    %v237 = vpop.f32.mrb[0].mxu0
    %v238 = vadd.f32 0.0, %v237
    %239 = vdwg.mxu0
    %240 = vmatprep.subr.mxu0 0.0
    %241 = vmatpush1.msra.mxu0 %v139
    %242 = vmatprep.subr.mxu0 0.0
    %243 = vmatpush1.msra.mxu0 %v142
    %244 = vmatprep.subr.mxu0 0.0
    %245 = vmatpush1.msra.mxu0 %v145
    %246 = vmatprep.subr.mxu0 0.0
    %247 = vmatpush1.msra.mxu0 %v148
    %248 = vmatprep.subr.mxu0 0.0
    %249 = vmatpush1.msra.mxu0 0.0
    %250 = vmatprep.subr.mxu0 0.0
    %251 = vmatpush1.msra.mxu0 0.0
    %252 = vmatprep.subr.mxu0 0.0
    %253 = vmatpush1.msra.mxu0 0.0
    %254 = vmatprep.subr.mxu0 0.0
    %255 = vmatpush1.msra.mxu0 0.0
    %256 = vmatprep.subr.mxu0 0.0
    %257 = vmatpush1.msra.mxu0 0.0
    %258 = vmatprep.subr.mxu0 0.0
    %259 = vmatpush1.msra.mxu0 0.0
    %260 = vmatprep.subr.mxu0 0.0
    %261 = vmatpush1.msra.mxu0 0.0
    %262 = vmatprep.subr.mxu0 0.0
    %263 = vmatpush1.msra.mxu0 0.0
    %264 = vmatprep.subr.mxu0 0.0
    %265 = vmatpush1.msra.mxu0 0.0
    %266 = vmatprep.subr.mxu0 0.0
    %267 = vmatpush1.msra.mxu0 0.0
    %268 = vmatprep.subr.mxu0 0.0
    %269 = vmatpush1.msra.mxu0 0.0
    %270 = vmatprep.subr.mxu0 0.0
    %271 = vmatpush1.msra.mxu0 0.0
    %272 = vmatprep.subr.mxu0 0.0
    %273 = vmatpush1.msra.mxu0 0.0
    %274 = vmatprep.subr.mxu0 0.0
    %275 = vmatpush1.msra.mxu0 0.0
    %276 = vmatprep.subr.mxu0 0.0
    %277 = vmatpush1.msra.mxu0 0.0
    %278 = vmatprep.subr.mxu0 0.0
    %279 = vmatpush1.msra.mxu0 0.0
    %280 = vmatprep.subr.mxu0 0.0
    %281 = vmatpush1.msra.mxu0 0.0
    %282 = vmatprep.subr.mxu0 0.0
    %283 = vmatpush1.msra.mxu0 0.0
    %284 = vmatprep.subr.mxu0 0.0
    %285 = vmatpush1.msra.mxu0 0.0
    %286 = vmatprep.subr.mxu0 0.0
    %287 = vmatpush1.msra.mxu0 0.0
    %288 = vmatprep.subr.mxu0 0.0
    %289 = vmatpush1.msra.mxu0 0.0
    %290 = vmatprep.subr.mxu0 0.0
    %291 = vmatpush1.msra.mxu0 0.0
    %292 = vmatprep.subr.mxu0 0.0
    %293 = vmatpush1.msra.mxu0 0.0
    %294 = vmatprep.subr.mxu0 0.0
    %295 = vmatpush1.msra.mxu0 0.0
    %296 = vmatprep.subr.mxu0 0.0
    %297 = vmatpush1.msra.mxu0 0.0
    %298 = vmatprep.subr.mxu0 0.0
    %299 = vmatpush1.msra.mxu0 0.0
    %300 = vmatprep.subr.mxu0 0.0
    %301 = vmatpush1.msra.mxu0 0.0
    %302 = vmatprep.subr.mxu0 0.0
    %303 = vmatpush1.msra.mxu0 0.0
    %304 = vmatprep.mubr.f32.mxu0 0.0
    %305 = vmatmul.mubr.f32.gmra.mrb[0].mxu0 %v167
    %v306 = vpop.f32.mrb[0].mxu0
    %v307 = vadd.f32 0.0, %v306
    %v308 = vpop.f32.mrb[0].mxu0
    %309 = vdwg.mxu0
    %v311 = vsel %vm165, %v163, 0
    %313 = vmatprep.subr.mxu0 %v126
    %314 = vmatpush1.msra.mxu0 %v125
    %315 = vmatprep.subr.mxu0 %v129
    %316 = vmatpush1.msra.mxu0 %v128
    %317 = vmatprep.subr.mxu0 %v132
    %318 = vmatpush1.msra.mxu0 %v131
    %319 = vmatprep.subr.mxu0 %v135
    %320 = vmatpush1.msra.mxu0 %v134
    %321 = vmatprep.subr.mxu0 0.0
    %322 = vmatpush1.msra.mxu0 0.0
    %323 = vmatprep.subr.mxu0 0.0
    %324 = vmatpush1.msra.mxu0 0.0
    %325 = vmatprep.subr.mxu0 0.0
    %326 = vmatpush1.msra.mxu0 0.0
    %327 = vmatprep.subr.mxu0 0.0
    %328 = vmatpush1.msra.mxu0 0.0
    %329 = vmatprep.subr.mxu0 0.0
    %330 = vmatpush1.msra.mxu0 0.0
    %331 = vmatprep.subr.mxu0 0.0
    %332 = vmatpush1.msra.mxu0 0.0
    %333 = vmatprep.subr.mxu0 0.0
    %334 = vmatpush1.msra.mxu0 0.0
    %335 = vmatprep.subr.mxu0 0.0
    %336 = vmatpush1.msra.mxu0 0.0
    %337 = vmatprep.subr.mxu0 0.0
    %338 = vmatpush1.msra.mxu0 0.0
    %339 = vmatprep.subr.mxu0 0.0
    %340 = vmatpush1.msra.mxu0 0.0
    %341 = vmatprep.subr.mxu0 0.0
    %342 = vmatpush1.msra.mxu0 0.0
    %343 = vmatprep.subr.mxu0 0.0
    %344 = vmatpush1.msra.mxu0 0.0
    %345 = vmatprep.subr.mxu0 0.0
    %346 = vmatpush1.msra.mxu0 0.0
    %347 = vmatprep.subr.mxu0 0.0
    %348 = vmatpush1.msra.mxu0 0.0
    %349 = vmatprep.subr.mxu0 0.0
    %350 = vmatpush1.msra.mxu0 0.0
    %351 = vmatprep.subr.mxu0 0.0
    %352 = vmatpush1.msra.mxu0 0.0
    %353 = vmatprep.subr.mxu0 0.0
    %354 = vmatpush1.msra.mxu0 0.0
    %355 = vmatprep.subr.mxu0 0.0
    %356 = vmatpush1.msra.mxu0 0.0
    %357 = vmatprep.subr.mxu0 0.0
    %358 = vmatpush1.msra.mxu0 0.0
    %359 = vmatprep.subr.mxu0 0.0
    %360 = vmatpush1.msra.mxu0 0.0
    %361 = vmatprep.subr.mxu0 0.0
    %362 = vmatpush1.msra.mxu0 0.0
    %363 = vmatprep.subr.mxu0 0.0
    %364 = vmatpush1.msra.mxu0 0.0
    %365 = vmatprep.subr.mxu0 0.0
    %366 = vmatpush1.msra.mxu0 0.0
    %367 = vmatprep.subr.mxu0 0.0
    %368 = vmatpush1.msra.mxu0 0.0
    %369 = vmatprep.subr.mxu0 0.0
    %370 = vmatpush1.msra.mxu0 0.0
    %371 = vmatprep.subr.mxu0 0.0
    %372 = vmatpush1.msra.mxu0 0.0
    %373 = vmatprep.subr.mxu0 0.0
    %374 = vmatpush1.msra.mxu0 0.0
    %375 = vmatprep.subr.mxu0 0.0
    %376 = vmatpush1.msra.mxu0 0.0
    %377 = vmatprep.mubr.f32.mxu0 0.0
    %378 = vmatmul.mubr.f32.gmra.mrb[0].mxu0 %v311
    %v379 = vpop.f32.mrb[0].mxu0
    %v380 = vadd.f32 %v236, %v379
    %v381 = vpop.f32.mrb[0].mxu0
    %v382 = vadd.f32 %v238, %v381
    %383 = vdwg.mxu0
    %384 = vmatprep.subr.mxu0 0.0
    %385 = vmatpush1.msra.mxu0 %v127
    %386 = vmatprep.subr.mxu0 0.0
    %387 = vmatpush1.msra.mxu0 %v130
    %388 = vmatprep.subr.mxu0 0.0
    %389 = vmatpush1.msra.mxu0 %v133
    %390 = vmatprep.subr.mxu0 0.0
    %391 = vmatpush1.msra.mxu0 %v136
    %392 = vmatprep.subr.mxu0 0.0
    %393 = vmatpush1.msra.mxu0 0.0
    %394 = vmatprep.subr.mxu0 0.0
    %395 = vmatpush1.msra.mxu0 0.0
    %396 = vmatprep.subr.mxu0 0.0
    %397 = vmatpush1.msra.mxu0 0.0
    %398 = vmatprep.subr.mxu0 0.0
    %399 = vmatpush1.msra.mxu0 0.0
    %400 = vmatprep.subr.mxu0 0.0
    %401 = vmatpush1.msra.mxu0 0.0
    %402 = vmatprep.subr.mxu0 0.0
    %403 = vmatpush1.msra.mxu0 0.0
    %404 = vmatprep.subr.mxu0 0.0
    %405 = vmatpush1.msra.mxu0 0.0
    %406 = vmatprep.subr.mxu0 0.0
    %407 = vmatpush1.msra.mxu0 0.0
    %408 = vmatprep.subr.mxu0 0.0
    %409 = vmatpush1.msra.mxu0 0.0
    %410 = vmatprep.subr.mxu0 0.0
    %411 = vmatpush1.msra.mxu0 0.0
    %412 = vmatprep.subr.mxu0 0.0
    %413 = vmatpush1.msra.mxu0 0.0
    %414 = vmatprep.subr.mxu0 0.0
    %415 = vmatpush1.msra.mxu0 0.0
    %416 = vmatprep.subr.mxu0 0.0
    %417 = vmatpush1.msra.mxu0 0.0
    %418 = vmatprep.subr.mxu0 0.0
    %419 = vmatpush1.msra.mxu0 0.0
    %420 = vmatprep.subr.mxu0 0.0
    %421 = vmatpush1.msra.mxu0 0.0
    %422 = vmatprep.subr.mxu0 0.0
    %423 = vmatpush1.msra.mxu0 0.0
    %424 = vmatprep.subr.mxu0 0.0
    %425 = vmatpush1.msra.mxu0 0.0
    %426 = vmatprep.subr.mxu0 0.0
    %427 = vmatpush1.msra.mxu0 0.0
    %428 = vmatprep.subr.mxu0 0.0
    %429 = vmatpush1.msra.mxu0 0.0
    %430 = vmatprep.subr.mxu0 0.0
    %431 = vmatpush1.msra.mxu0 0.0
    %432 = vmatprep.subr.mxu0 0.0
    %433 = vmatpush1.msra.mxu0 0.0
    %434 = vmatprep.subr.mxu0 0.0
    %435 = vmatpush1.msra.mxu0 0.0
    %436 = vmatprep.subr.mxu0 0.0
    %437 = vmatpush1.msra.mxu0 0.0
    %438 = vmatprep.subr.mxu0 0.0
    %439 = vmatpush1.msra.mxu0 0.0
    %440 = vmatprep.subr.mxu0 0.0
    %441 = vmatpush1.msra.mxu0 0.0
    %442 = vmatprep.subr.mxu0 0.0
    %443 = vmatpush1.msra.mxu0 0.0
    %444 = vmatprep.subr.mxu0 0.0
    %445 = vmatpush1.msra.mxu0 0.0
    %446 = vmatprep.subr.mxu0 0.0
    %447 = vmatpush1.msra.mxu0 0.0
    %448 = vmatprep.mubr.f32.mxu0 0.0
    %449 = vmatmul.mubr.f32.gmra.mrb[0].mxu0 %v311
    %v450 = vpop.f32.mrb[0].mxu0
    %v451 = vadd.f32 %v307, %v450
    %v452 = vpop.f32.mrb[0].mxu0
    %453 = vdwg.mxu0
    %v455 = vlaneseq
    %v456 = vshrl.u32 %v455, 7
    %v457 = vsub.s32 0, %v456
    %v458 = vrot.slane %v161, %v457
    %v459 = vlaneseq
    %v460 = vshrl.u32 %v459, 7
    %v461 = vsub.s32 1, %v460
    %v462 = vrot.slane %v161, %v461
    %v463 = vlaneseq
    %v464 = vshrl.u32 %v463, 7
    %v465 = vsub.s32 2, %v464
    %v466 = vrot.slane %v161, %v465
    %v470 = vadd.f32 %v380, %v458
    %v471 = vadd.f32 %v382, %v462
    %v472 = vadd.f32 %v451, %v466
    %v474 = vsel %vm165, %v162, 0
    %476 = vmatprep.subr.mxu0 %v150
    %477 = vmatpush1.msra.mxu0 %v149
    %478 = vmatprep.subr.mxu0 %v152
    %479 = vmatpush1.msra.mxu0 %v151
    %480 = vmatprep.subr.mxu0 %v154
    %481 = vmatpush1.msra.mxu0 %v153
    %482 = vmatprep.subr.mxu0 %v156
    %483 = vmatpush1.msra.mxu0 %v155
    %484 = vmatprep.subr.mxu0 0.0
    %485 = vmatpush1.msra.mxu0 0.0
    %486 = vmatprep.subr.mxu0 0.0
    %487 = vmatpush1.msra.mxu0 0.0
    %488 = vmatprep.subr.mxu0 0.0
    %489 = vmatpush1.msra.mxu0 0.0
    %490 = vmatprep.subr.mxu0 0.0
    %491 = vmatpush1.msra.mxu0 0.0
    %492 = vmatprep.subr.mxu0 0.0
    %493 = vmatpush1.msra.mxu0 0.0
    %494 = vmatprep.subr.mxu0 0.0
    %495 = vmatpush1.msra.mxu0 0.0
    %496 = vmatprep.subr.mxu0 0.0
    %497 = vmatpush1.msra.mxu0 0.0
    %498 = vmatprep.subr.mxu0 0.0
    %499 = vmatpush1.msra.mxu0 0.0
    %500 = vmatprep.subr.mxu0 0.0
    %501 = vmatpush1.msra.mxu0 0.0
    %502 = vmatprep.subr.mxu0 0.0
    %503 = vmatpush1.msra.mxu0 0.0
    %504 = vmatprep.subr.mxu0 0.0
    %505 = vmatpush1.msra.mxu0 0.0
    %506 = vmatprep.subr.mxu0 0.0
    %507 = vmatpush1.msra.mxu0 0.0
    %508 = vmatprep.subr.mxu0 0.0
    %509 = vmatpush1.msra.mxu0 0.0
    %510 = vmatprep.subr.mxu0 0.0
    %511 = vmatpush1.msra.mxu0 0.0
    %512 = vmatprep.subr.mxu0 0.0
    %513 = vmatpush1.msra.mxu0 0.0
    %514 = vmatprep.subr.mxu0 0.0
    %515 = vmatpush1.msra.mxu0 0.0
    %516 = vmatprep.subr.mxu0 0.0
    %517 = vmatpush1.msra.mxu0 0.0
    %518 = vmatprep.subr.mxu0 0.0
    %519 = vmatpush1.msra.mxu0 0.0
    %520 = vmatprep.subr.mxu0 0.0
    %521 = vmatpush1.msra.mxu0 0.0
    %522 = vmatprep.subr.mxu0 0.0
    %523 = vmatpush1.msra.mxu0 0.0
    %524 = vmatprep.subr.mxu0 0.0
    %525 = vmatpush1.msra.mxu0 0.0
    %526 = vmatprep.subr.mxu0 0.0
    %527 = vmatpush1.msra.mxu0 0.0
    %528 = vmatprep.subr.mxu0 0.0
    %529 = vmatpush1.msra.mxu0 0.0
    %530 = vmatprep.subr.mxu0 0.0
    %531 = vmatpush1.msra.mxu0 0.0
    %532 = vmatprep.subr.mxu0 0.0
    %533 = vmatpush1.msra.mxu0 0.0
    %534 = vmatprep.subr.mxu0 0.0
    %535 = vmatpush1.msra.mxu0 0.0
    %536 = vmatprep.subr.mxu0 0.0
    %537 = vmatpush1.msra.mxu0 0.0
    %538 = vmatprep.subr.mxu0 0.0
    %539 = vmatpush1.msra.mxu0 0.0
    %540 = vmatprep.mubr.f32.mxu0 0.0
    %541 = vmatmul.mubr.f32.gmra.mrb[0].mxu0 %v474
    %v542 = vpop.f32.mrb[0].mxu0
    %v543 = vadd.f32 0.0, %v542
    %v544 = vpop.f32.mrb[0].mxu0
    %v545 = vadd.f32 0.0, %v544
    %546 = vdwg.mxu0
    %v547 = vadd.f32 %v470, %v543
    %v548 = vxor.u32 %v547, 2147483648
    %v549 = vmul.f32 %v548, 1.442695
    %v550 = vpow.pop %v549
    %v551 = vadd.f32 %v550, 1.0
    %v552 = vrcp.pop %v551
    %v553 = vmul.f32 1.0, %v552
    %v554 = vadd.f32 %v471, %v545
    %v555 = vxor.u32 %v554, 2147483648
    %v556 = vmul.f32 %v555, 1.442695
    %v557 = vpow.pop %v556
    %v558 = vadd.f32 %v557, 1.0
    %v559 = vrcp.pop %v558
    %v560 = vmul.f32 1.0, %v559
    %v561 = vmul.f32 %v162, %v560
    %v563 = vsel %vm165, %v561, 0
    %565 = vmatprep.subr.mxu0 0.0
    %566 = vmatpush1.msra.mxu0 %v157
    %567 = vmatprep.subr.mxu0 0.0
    %568 = vmatpush1.msra.mxu0 %v158
    %569 = vmatprep.subr.mxu0 0.0
    %570 = vmatpush1.msra.mxu0 %v159
    %571 = vmatprep.subr.mxu0 0.0
    %572 = vmatpush1.msra.mxu0 %v160
    %573 = vmatprep.subr.mxu0 0.0
    %574 = vmatpush1.msra.mxu0 0.0
    %575 = vmatprep.subr.mxu0 0.0
    %576 = vmatpush1.msra.mxu0 0.0
    %577 = vmatprep.subr.mxu0 0.0
    %578 = vmatpush1.msra.mxu0 0.0
    %579 = vmatprep.subr.mxu0 0.0
    %580 = vmatpush1.msra.mxu0 0.0
    %581 = vmatprep.subr.mxu0 0.0
    %582 = vmatpush1.msra.mxu0 0.0
    %583 = vmatprep.subr.mxu0 0.0
    %584 = vmatpush1.msra.mxu0 0.0
    %585 = vmatprep.subr.mxu0 0.0
    %586 = vmatpush1.msra.mxu0 0.0
    %587 = vmatprep.subr.mxu0 0.0
    %588 = vmatpush1.msra.mxu0 0.0
    %589 = vmatprep.subr.mxu0 0.0
    %590 = vmatpush1.msra.mxu0 0.0
    %591 = vmatprep.subr.mxu0 0.0
    %592 = vmatpush1.msra.mxu0 0.0
    %593 = vmatprep.subr.mxu0 0.0
    %594 = vmatpush1.msra.mxu0 0.0
    %595 = vmatprep.subr.mxu0 0.0
    %596 = vmatpush1.msra.mxu0 0.0
    %597 = vmatprep.subr.mxu0 0.0
    %598 = vmatpush1.msra.mxu0 0.0
    %599 = vmatprep.subr.mxu0 0.0
    %600 = vmatpush1.msra.mxu0 0.0
    %601 = vmatprep.subr.mxu0 0.0
    %602 = vmatpush1.msra.mxu0 0.0
    %603 = vmatprep.subr.mxu0 0.0
    %604 = vmatpush1.msra.mxu0 0.0
    %605 = vmatprep.subr.mxu0 0.0
    %606 = vmatpush1.msra.mxu0 0.0
    %607 = vmatprep.subr.mxu0 0.0
    %608 = vmatpush1.msra.mxu0 0.0
    %609 = vmatprep.subr.mxu0 0.0
    %610 = vmatpush1.msra.mxu0 0.0
    %611 = vmatprep.subr.mxu0 0.0
    %612 = vmatpush1.msra.mxu0 0.0
    %613 = vmatprep.subr.mxu0 0.0
    %614 = vmatpush1.msra.mxu0 0.0
    %615 = vmatprep.subr.mxu0 0.0
    %616 = vmatpush1.msra.mxu0 0.0
    %617 = vmatprep.subr.mxu0 0.0
    %618 = vmatpush1.msra.mxu0 0.0
    %619 = vmatprep.subr.mxu0 0.0
    %620 = vmatpush1.msra.mxu0 0.0
    %621 = vmatprep.subr.mxu0 0.0
    %622 = vmatpush1.msra.mxu0 0.0
    %623 = vmatprep.subr.mxu0 0.0
    %624 = vmatpush1.msra.mxu0 0.0
    %625 = vmatprep.subr.mxu0 0.0
    %626 = vmatpush1.msra.mxu0 0.0
    %627 = vmatprep.subr.mxu0 0.0
    %628 = vmatpush1.msra.mxu0 0.0
    %629 = vmatprep.mubr.f32.mxu0 0.0
    %630 = vmatmul.mubr.f32.gmra.mrb[0].mxu0 %v563
    %v631 = vpop.f32.mrb[0].mxu0
    %v632 = vadd.f32 0.0, %v631
    %v633 = vpop.f32.mrb[0].mxu0
    %634 = vdwg.mxu0
    %v635 = vadd.f32 %v472, %v632
    %v636 = vtanh.pop %v635
    %v637 = vmul.f32 %v636, %v553
    %v638 = vsub.f32 1.0, %v553
    %v639 = vmul.f32 %v162, %v638
    %v640 = vadd.f32 %v637, %v639
    %641 = vst.msk [vmem:[#allocation14] sm:$0xff] %vm165, %v640
    %v642 = vld [vmem:[#allocation2 + $0x8] sm:$0xff]
    %v643 = vld [vmem:[#allocation5 + $0x8] sm:$0xff]
    %v644 = vld [vmem:[#allocation7 + $0x8] sm:$0xff]
    %v646 = vsel %vm165, %v644, 0
    %648 = vmatprep.subr.mxu0 %v138
    %649 = vmatpush1.msra.mxu0 %v137
    %650 = vmatprep.subr.mxu0 %v141
    %651 = vmatpush1.msra.mxu0 %v140
    %652 = vmatprep.subr.mxu0 %v144
    %653 = vmatpush1.msra.mxu0 %v143
    %654 = vmatprep.subr.mxu0 %v147
    %655 = vmatpush1.msra.mxu0 %v146
    %656 = vmatprep.subr.mxu0 0.0
    %657 = vmatpush1.msra.mxu0 0.0
    %658 = vmatprep.subr.mxu0 0.0
    %659 = vmatpush1.msra.mxu0 0.0
    %660 = vmatprep.subr.mxu0 0.0
    %661 = vmatpush1.msra.mxu0 0.0
    %662 = vmatprep.subr.mxu0 0.0
    %663 = vmatpush1.msra.mxu0 0.0
    %664 = vmatprep.subr.mxu0 0.0
    %665 = vmatpush1.msra.mxu0 0.0
    %666 = vmatprep.subr.mxu0 0.0
    %667 = vmatpush1.msra.mxu0 0.0
    %668 = vmatprep.subr.mxu0 0.0
    %669 = vmatpush1.msra.mxu0 0.0
    %670 = vmatprep.subr.mxu0 0.0
    %671 = vmatpush1.msra.mxu0 0.0
    %672 = vmatprep.subr.mxu0 0.0
    %673 = vmatpush1.msra.mxu0 0.0
    %674 = vmatprep.subr.mxu0 0.0
    %675 = vmatpush1.msra.mxu0 0.0
    %676 = vmatprep.subr.mxu0 0.0
    %677 = vmatpush1.msra.mxu0 0.0
    %678 = vmatprep.subr.mxu0 0.0
    %679 = vmatpush1.msra.mxu0 0.0
    %680 = vmatprep.subr.mxu0 0.0
    %681 = vmatpush1.msra.mxu0 0.0
    %682 = vmatprep.subr.mxu0 0.0
    %683 = vmatpush1.msra.mxu0 0.0
    %684 = vmatprep.subr.mxu0 0.0
    %685 = vmatpush1.msra.mxu0 0.0
    %686 = vmatprep.subr.mxu0 0.0
    %687 = vmatpush1.msra.mxu0 0.0
    %688 = vmatprep.subr.mxu0 0.0
    %689 = vmatpush1.msra.mxu0 0.0
    %690 = vmatprep.subr.mxu0 0.0
    %691 = vmatpush1.msra.mxu0 0.0
    %692 = vmatprep.subr.mxu0 0.0
    %693 = vmatpush1.msra.mxu0 0.0
    %694 = vmatprep.subr.mxu0 0.0
    %695 = vmatpush1.msra.mxu0 0.0
    %696 = vmatprep.subr.mxu0 0.0
    %697 = vmatpush1.msra.mxu0 0.0
    %698 = vmatprep.subr.mxu0 0.0
    %699 = vmatpush1.msra.mxu0 0.0
    %700 = vmatprep.subr.mxu0 0.0
    %701 = vmatpush1.msra.mxu0 0.0
    %702 = vmatprep.subr.mxu0 0.0
    %703 = vmatpush1.msra.mxu0 0.0
    %704 = vmatprep.subr.mxu0 0.0
    %705 = vmatpush1.msra.mxu0 0.0
    %706 = vmatprep.subr.mxu0 0.0
    %707 = vmatpush1.msra.mxu0 0.0
    %708 = vmatprep.subr.mxu0 0.0
    %709 = vmatpush1.msra.mxu0 0.0
    %710 = vmatprep.subr.mxu0 0.0
    %711 = vmatpush1.msra.mxu0 0.0
    %712 = vmatprep.mubr.f32.mxu0 0.0
    %713 = vmatmul.mubr.f32.gmra.mrb[0].mxu0 %v646
    %v714 = vpop.f32.mrb[0].mxu0
    %v715 = vadd.f32 0.0, %v714
    %v716 = vpop.f32.mrb[0].mxu0
    %v717 = vadd.f32 0.0, %v716
    %718 = vdwg.mxu0
    %719 = vmatprep.subr.mxu0 0.0
    %720 = vmatpush1.msra.mxu0 %v139
    %721 = vmatprep.subr.mxu0 0.0
    %722 = vmatpush1.msra.mxu0 %v142
    %723 = vmatprep.subr.mxu0 0.0
    %724 = vmatpush1.msra.mxu0 %v145
    %725 = vmatprep.subr.mxu0 0.0
    %726 = vmatpush1.msra.mxu0 %v148
    %727 = vmatprep.subr.mxu0 0.0
    %728 = vmatpush1.msra.mxu0 0.0
    %729 = vmatprep.subr.mxu0 0.0
    %730 = vmatpush1.msra.mxu0 0.0
    %731 = vmatprep.subr.mxu0 0.0
    %732 = vmatpush1.msra.mxu0 0.0
    %733 = vmatprep.subr.mxu0 0.0
    %734 = vmatpush1.msra.mxu0 0.0
    %735 = vmatprep.subr.mxu0 0.0
    %736 = vmatpush1.msra.mxu0 0.0
    %737 = vmatprep.subr.mxu0 0.0
    %738 = vmatpush1.msra.mxu0 0.0
    %739 = vmatprep.subr.mxu0 0.0
    %740 = vmatpush1.msra.mxu0 0.0
    %741 = vmatprep.subr.mxu0 0.0
    %742 = vmatpush1.msra.mxu0 0.0
    %743 = vmatprep.subr.mxu0 0.0
    %744 = vmatpush1.msra.mxu0 0.0
    %745 = vmatprep.subr.mxu0 0.0
    %746 = vmatpush1.msra.mxu0 0.0
    %747 = vmatprep.subr.mxu0 0.0
    %748 = vmatpush1.msra.mxu0 0.0
    %749 = vmatprep.subr.mxu0 0.0
    %750 = vmatpush1.msra.mxu0 0.0
    %751 = vmatprep.subr.mxu0 0.0
    %752 = vmatpush1.msra.mxu0 0.0
    %753 = vmatprep.subr.mxu0 0.0
    %754 = vmatpush1.msra.mxu0 0.0
    %755 = vmatprep.subr.mxu0 0.0
    %756 = vmatpush1.msra.mxu0 0.0
    %757 = vmatprep.subr.mxu0 0.0
    %758 = vmatpush1.msra.mxu0 0.0
    %759 = vmatprep.subr.mxu0 0.0
    %760 = vmatpush1.msra.mxu0 0.0
    %761 = vmatprep.subr.mxu0 0.0
    %762 = vmatpush1.msra.mxu0 0.0
    %763 = vmatprep.subr.mxu0 0.0
    %764 = vmatpush1.msra.mxu0 0.0
    %765 = vmatprep.subr.mxu0 0.0
    %766 = vmatpush1.msra.mxu0 0.0
    %767 = vmatprep.subr.mxu0 0.0
    %768 = vmatpush1.msra.mxu0 0.0
    %769 = vmatprep.subr.mxu0 0.0
    %770 = vmatpush1.msra.mxu0 0.0
    %771 = vmatprep.subr.mxu0 0.0
    %772 = vmatpush1.msra.mxu0 0.0
    %773 = vmatprep.subr.mxu0 0.0
    %774 = vmatpush1.msra.mxu0 0.0
    %775 = vmatprep.subr.mxu0 0.0
    %776 = vmatpush1.msra.mxu0 0.0
    %777 = vmatprep.subr.mxu0 0.0
    %778 = vmatpush1.msra.mxu0 0.0
    %779 = vmatprep.subr.mxu0 0.0
    %780 = vmatpush1.msra.mxu0 0.0
    %781 = vmatprep.subr.mxu0 0.0
    %782 = vmatpush1.msra.mxu0 0.0
    %783 = vmatprep.mubr.f32.mxu0 0.0
    %784 = vmatmul.mubr.f32.gmra.mrb[0].mxu0 %v646
    %v785 = vpop.f32.mrb[0].mxu0
    %v786 = vadd.f32 0.0, %v785
    %v787 = vpop.f32.mrb[0].mxu0
    %788 = vdwg.mxu0
    %v790 = vsel %vm165, %v643, 0
    %792 = vmatprep.subr.mxu0 %v126
    %793 = vmatpush1.msra.mxu0 %v125
    %794 = vmatprep.subr.mxu0 %v129
    %795 = vmatpush1.msra.mxu0 %v128
    %796 = vmatprep.subr.mxu0 %v132
    %797 = vmatpush1.msra.mxu0 %v131
    %798 = vmatprep.subr.mxu0 %v135
    %799 = vmatpush1.msra.mxu0 %v134
    %800 = vmatprep.subr.mxu0 0.0
    %801 = vmatpush1.msra.mxu0 0.0
    %802 = vmatprep.subr.mxu0 0.0
    %803 = vmatpush1.msra.mxu0 0.0
    %804 = vmatprep.subr.mxu0 0.0
    %805 = vmatpush1.msra.mxu0 0.0
    %806 = vmatprep.subr.mxu0 0.0
    %807 = vmatpush1.msra.mxu0 0.0
    %808 = vmatprep.subr.mxu0 0.0
    %809 = vmatpush1.msra.mxu0 0.0
    %810 = vmatprep.subr.mxu0 0.0
    %811 = vmatpush1.msra.mxu0 0.0
    %812 = vmatprep.subr.mxu0 0.0
    %813 = vmatpush1.msra.mxu0 0.0
    %814 = vmatprep.subr.mxu0 0.0
    %815 = vmatpush1.msra.mxu0 0.0
    %816 = vmatprep.subr.mxu0 0.0
    %817 = vmatpush1.msra.mxu0 0.0
    %818 = vmatprep.subr.mxu0 0.0
    %819 = vmatpush1.msra.mxu0 0.0
    %820 = vmatprep.subr.mxu0 0.0
    %821 = vmatpush1.msra.mxu0 0.0
    %822 = vmatprep.subr.mxu0 0.0
    %823 = vmatpush1.msra.mxu0 0.0
    %824 = vmatprep.subr.mxu0 0.0
    %825 = vmatpush1.msra.mxu0 0.0
    %826 = vmatprep.subr.mxu0 0.0
    %827 = vmatpush1.msra.mxu0 0.0
    %828 = vmatprep.subr.mxu0 0.0
    %829 = vmatpush1.msra.mxu0 0.0
    %830 = vmatprep.subr.mxu0 0.0
    %831 = vmatpush1.msra.mxu0 0.0
    %832 = vmatprep.subr.mxu0 0.0
    %833 = vmatpush1.msra.mxu0 0.0
    %834 = vmatprep.subr.mxu0 0.0
    %835 = vmatpush1.msra.mxu0 0.0
    %836 = vmatprep.subr.mxu0 0.0
    %837 = vmatpush1.msra.mxu0 0.0
    %838 = vmatprep.subr.mxu0 0.0
    %839 = vmatpush1.msra.mxu0 0.0
    %840 = vmatprep.subr.mxu0 0.0
    %841 = vmatpush1.msra.mxu0 0.0
    %842 = vmatprep.subr.mxu0 0.0
    %843 = vmatpush1.msra.mxu0 0.0
    %844 = vmatprep.subr.mxu0 0.0
    %845 = vmatpush1.msra.mxu0 0.0
    %846 = vmatprep.subr.mxu0 0.0
    %847 = vmatpush1.msra.mxu0 0.0
    %848 = vmatprep.subr.mxu0 0.0
    %849 = vmatpush1.msra.mxu0 0.0
    %850 = vmatprep.subr.mxu0 0.0
    %851 = vmatpush1.msra.mxu0 0.0
    %852 = vmatprep.subr.mxu0 0.0
    %853 = vmatpush1.msra.mxu0 0.0
    %854 = vmatprep.subr.mxu0 0.0
    %855 = vmatpush1.msra.mxu0 0.0
    %856 = vmatprep.mubr.f32.mxu0 0.0
    %857 = vmatmul.mubr.f32.gmra.mrb[0].mxu0 %v790
    %v858 = vpop.f32.mrb[0].mxu0
    %v859 = vadd.f32 %v715, %v858
    %v860 = vpop.f32.mrb[0].mxu0
    %v861 = vadd.f32 %v717, %v860
    %862 = vdwg.mxu0
    %863 = vmatprep.subr.mxu0 0.0
    %864 = vmatpush1.msra.mxu0 %v127
    %865 = vmatprep.subr.mxu0 0.0
    %866 = vmatpush1.msra.mxu0 %v130
    %867 = vmatprep.subr.mxu0 0.0
    %868 = vmatpush1.msra.mxu0 %v133
    %869 = vmatprep.subr.mxu0 0.0
    %870 = vmatpush1.msra.mxu0 %v136
    %871 = vmatprep.subr.mxu0 0.0
    %872 = vmatpush1.msra.mxu0 0.0
    %873 = vmatprep.subr.mxu0 0.0
    %874 = vmatpush1.msra.mxu0 0.0
    %875 = vmatprep.subr.mxu0 0.0
    %876 = vmatpush1.msra.mxu0 0.0
    %877 = vmatprep.subr.mxu0 0.0
    %878 = vmatpush1.msra.mxu0 0.0
    %879 = vmatprep.subr.mxu0 0.0
    %880 = vmatpush1.msra.mxu0 0.0
    %881 = vmatprep.subr.mxu0 0.0
    %882 = vmatpush1.msra.mxu0 0.0
    %883 = vmatprep.subr.mxu0 0.0
    %884 = vmatpush1.msra.mxu0 0.0
    %885 = vmatprep.subr.mxu0 0.0
    %886 = vmatpush1.msra.mxu0 0.0
    %887 = vmatprep.subr.mxu0 0.0
    %888 = vmatpush1.msra.mxu0 0.0
    %889 = vmatprep.subr.mxu0 0.0
    %890 = vmatpush1.msra.mxu0 0.0
    %891 = vmatprep.subr.mxu0 0.0
    %892 = vmatpush1.msra.mxu0 0.0
    %893 = vmatprep.subr.mxu0 0.0
    %894 = vmatpush1.msra.mxu0 0.0
    %895 = vmatprep.subr.mxu0 0.0
    %896 = vmatpush1.msra.mxu0 0.0
    %897 = vmatprep.subr.mxu0 0.0
    %898 = vmatpush1.msra.mxu0 0.0
    %899 = vmatprep.subr.mxu0 0.0
    %900 = vmatpush1.msra.mxu0 0.0
    %901 = vmatprep.subr.mxu0 0.0
    %902 = vmatpush1.msra.mxu0 0.0
    %903 = vmatprep.subr.mxu0 0.0
    %904 = vmatpush1.msra.mxu0 0.0
    %905 = vmatprep.subr.mxu0 0.0
    %906 = vmatpush1.msra.mxu0 0.0
    %907 = vmatprep.subr.mxu0 0.0
    %908 = vmatpush1.msra.mxu0 0.0
    %909 = vmatprep.subr.mxu0 0.0
    %910 = vmatpush1.msra.mxu0 0.0
    %911 = vmatprep.subr.mxu0 0.0
    %912 = vmatpush1.msra.mxu0 0.0
    %913 = vmatprep.subr.mxu0 0.0
    %914 = vmatpush1.msra.mxu0 0.0
    %915 = vmatprep.subr.mxu0 0.0
    %916 = vmatpush1.msra.mxu0 0.0
    %917 = vmatprep.subr.mxu0 0.0
    %918 = vmatpush1.msra.mxu0 0.0
    %919 = vmatprep.subr.mxu0 0.0
    %920 = vmatpush1.msra.mxu0 0.0
    %921 = vmatprep.subr.mxu0 0.0
    %922 = vmatpush1.msra.mxu0 0.0
    %923 = vmatprep.subr.mxu0 0.0
    %924 = vmatpush1.msra.mxu0 0.0
    %925 = vmatprep.subr.mxu0 0.0
    %926 = vmatpush1.msra.mxu0 0.0
    %927 = vmatprep.mubr.f32.mxu0 0.0
    %928 = vmatmul.mubr.f32.gmra.mrb[0].mxu0 %v790
    %v929 = vpop.f32.mrb[0].mxu0
    %v930 = vadd.f32 %v786, %v929
    %v931 = vpop.f32.mrb[0].mxu0
    %932 = vdwg.mxu0
    %v933 = vadd.f32 %v859, %v458
    %v934 = vadd.f32 %v861, %v462
    %v935 = vadd.f32 %v930, %v466
    %v937 = vsel %vm165, %v642, 0
    %939 = vmatprep.subr.mxu0 %v150
    %940 = vmatpush1.msra.mxu0 %v149
    %941 = vmatprep.subr.mxu0 %v152
    %942 = vmatpush1.msra.mxu0 %v151
    %943 = vmatprep.subr.mxu0 %v154
    %944 = vmatpush1.msra.mxu0 %v153
    %945 = vmatprep.subr.mxu0 %v156
    %946 = vmatpush1.msra.mxu0 %v155
    %947 = vmatprep.subr.mxu0 0.0
    %948 = vmatpush1.msra.mxu0 0.0
    %949 = vmatprep.subr.mxu0 0.0
    %950 = vmatpush1.msra.mxu0 0.0
    %951 = vmatprep.subr.mxu0 0.0
    %952 = vmatpush1.msra.mxu0 0.0
    %953 = vmatprep.subr.mxu0 0.0
    %954 = vmatpush1.msra.mxu0 0.0
    %955 = vmatprep.subr.mxu0 0.0
    %956 = vmatpush1.msra.mxu0 0.0
    %957 = vmatprep.subr.mxu0 0.0
    %958 = vmatpush1.msra.mxu0 0.0
    %959 = vmatprep.subr.mxu0 0.0
    %960 = vmatpush1.msra.mxu0 0.0
    %961 = vmatprep.subr.mxu0 0.0
    %962 = vmatpush1.msra.mxu0 0.0
    %963 = vmatprep.subr.mxu0 0.0
    %964 = vmatpush1.msra.mxu0 0.0
    %965 = vmatprep.subr.mxu0 0.0
    %966 = vmatpush1.msra.mxu0 0.0
    %967 = vmatprep.subr.mxu0 0.0
    %968 = vmatpush1.msra.mxu0 0.0
    %969 = vmatprep.subr.mxu0 0.0
    %970 = vmatpush1.msra.mxu0 0.0
    %971 = vmatprep.subr.mxu0 0.0
    %972 = vmatpush1.msra.mxu0 0.0
    %973 = vmatprep.subr.mxu0 0.0
    %974 = vmatpush1.msra.mxu0 0.0
    %975 = vmatprep.subr.mxu0 0.0
    %976 = vmatpush1.msra.mxu0 0.0
    %977 = vmatprep.subr.mxu0 0.0
    %978 = vmatpush1.msra.mxu0 0.0
    %979 = vmatprep.subr.mxu0 0.0
    %980 = vmatpush1.msra.mxu0 0.0
    %981 = vmatprep.subr.mxu0 0.0
    %982 = vmatpush1.msra.mxu0 0.0
    %983 = vmatprep.subr.mxu0 0.0
    %984 = vmatpush1.msra.mxu0 0.0
    %985 = vmatprep.subr.mxu0 0.0
    %986 = vmatpush1.msra.mxu0 0.0
    %987 = vmatprep.subr.mxu0 0.0
    %988 = vmatpush1.msra.mxu0 0.0
    %989 = vmatprep.subr.mxu0 0.0
    %990 = vmatpush1.msra.mxu0 0.0
    %991 = vmatprep.subr.mxu0 0.0
    %992 = vmatpush1.msra.mxu0 0.0
    %993 = vmatprep.subr.mxu0 0.0
    %994 = vmatpush1.msra.mxu0 0.0
    %995 = vmatprep.subr.mxu0 0.0
    %996 = vmatpush1.msra.mxu0 0.0
    %997 = vmatprep.subr.mxu0 0.0
    %998 = vmatpush1.msra.mxu0 0.0
    %999 = vmatprep.subr.mxu0 0.0
    %1000 = vmatpush1.msra.mxu0 0.0
    %1001 = vmatprep.subr.mxu0 0.0
    %1002 = vmatpush1.msra.mxu0 0.0
    %1003 = vmatprep.mubr.f32.mxu0 0.0
    %1004 = vmatmul.mubr.f32.gmra.mrb[0].mxu0 %v937
    %v1005 = vpop.f32.mrb[0].mxu0
    %v1006 = vadd.f32 0.0, %v1005
    %v1007 = vpop.f32.mrb[0].mxu0
    %v1008 = vadd.f32 0.0, %v1007
    %1009 = vdwg.mxu0
    %v1010 = vadd.f32 %v933, %v1006
    %v1011 = vxor.u32 %v1010, 2147483648
    %v1012 = vmul.f32 %v1011, 1.442695
    %v1013 = vpow.pop %v1012
    %v1014 = vadd.f32 %v1013, 1.0
    %v1015 = vrcp.pop %v1014
    %v1016 = vmul.f32 1.0, %v1015
    %v1017 = vadd.f32 %v934, %v1008
    %v1018 = vxor.u32 %v1017, 2147483648
    %v1019 = vmul.f32 %v1018, 1.442695
    %v1020 = vpow.pop %v1019
    %v1021 = vadd.f32 %v1020, 1.0
    %v1022 = vrcp.pop %v1021
    %v1023 = vmul.f32 1.0, %v1022
    %v1024 = vmul.f32 %v642, %v1023
    %v1026 = vsel %vm165, %v1024, 0
    %1028 = vmatprep.subr.mxu0 0.0
    %1029 = vmatpush1.msra.mxu0 %v157
    %1030 = vmatprep.subr.mxu0 0.0
    %1031 = vmatpush1.msra.mxu0 %v158
    %1032 = vmatprep.subr.mxu0 0.0
    %1033 = vmatpush1.msra.mxu0 %v159
    %1034 = vmatprep.subr.mxu0 0.0
    %1035 = vmatpush1.msra.mxu0 %v160
    %1036 = vmatprep.subr.mxu0 0.0
    %1037 = vmatpush1.msra.mxu0 0.0
    %1038 = vmatprep.subr.mxu0 0.0
    %1039 = vmatpush1.msra.mxu0 0.0
    %1040 = vmatprep.subr.mxu0 0.0
    %1041 = vmatpush1.msra.mxu0 0.0
    %1042 = vmatprep.subr.mxu0 0.0
    %1043 = vmatpush1.msra.mxu0 0.0
    %1044 = vmatprep.subr.mxu0 0.0
    %1045 = vmatpush1.msra.mxu0 0.0
    %1046 = vmatprep.subr.mxu0 0.0
    %1047 = vmatpush1.msra.mxu0 0.0
    %1048 = vmatprep.subr.mxu0 0.0
    %1049 = vmatpush1.msra.mxu0 0.0
    %1050 = vmatprep.subr.mxu0 0.0
    %1051 = vmatpush1.msra.mxu0 0.0
    %1052 = vmatprep.subr.mxu0 0.0
    %1053 = vmatpush1.msra.mxu0 0.0
    %1054 = vmatprep.subr.mxu0 0.0
    %1055 = vmatpush1.msra.mxu0 0.0
    %1056 = vmatprep.subr.mxu0 0.0
    %1057 = vmatpush1.msra.mxu0 0.0
    %1058 = vmatprep.subr.mxu0 0.0
    %1059 = vmatpush1.msra.mxu0 0.0
    %1060 = vmatprep.subr.mxu0 0.0
    %1061 = vmatpush1.msra.mxu0 0.0
    %1062 = vmatprep.subr.mxu0 0.0
    %1063 = vmatpush1.msra.mxu0 0.0
    %1064 = vmatprep.subr.mxu0 0.0
    %1065 = vmatpush1.msra.mxu0 0.0
    %1066 = vmatprep.subr.mxu0 0.0
    %1067 = vmatpush1.msra.mxu0 0.0
    %1068 = vmatprep.subr.mxu0 0.0
    %1069 = vmatpush1.msra.mxu0 0.0
    %1070 = vmatprep.subr.mxu0 0.0
    %1071 = vmatpush1.msra.mxu0 0.0
    %1072 = vmatprep.subr.mxu0 0.0
    %1073 = vmatpush1.msra.mxu0 0.0
    %1074 = vmatprep.subr.mxu0 0.0
    %1075 = vmatpush1.msra.mxu0 0.0
    %1076 = vmatprep.subr.mxu0 0.0
    %1077 = vmatpush1.msra.mxu0 0.0
    %1078 = vmatprep.subr.mxu0 0.0
    %1079 = vmatpush1.msra.mxu0 0.0
    %1080 = vmatprep.subr.mxu0 0.0
    %1081 = vmatpush1.msra.mxu0 0.0
    %1082 = vmatprep.subr.mxu0 0.0
    %1083 = vmatpush1.msra.mxu0 0.0
    %1084 = vmatprep.subr.mxu0 0.0
    %1085 = vmatpush1.msra.mxu0 0.0
    %1086 = vmatprep.subr.mxu0 0.0
    %1087 = vmatpush1.msra.mxu0 0.0
    %1088 = vmatprep.subr.mxu0 0.0
    %1089 = vmatpush1.msra.mxu0 0.0
    %1090 = vmatprep.subr.mxu0 0.0
    %1091 = vmatpush1.msra.mxu0 0.0
    %1092 = vmatprep.mubr.f32.mxu0 0.0
    %1093 = vmatmul.mubr.f32.gmra.mrb[0].mxu0 %v1026
    %v1094 = vpop.f32.mrb[0].mxu0
    %v1095 = vadd.f32 0.0, %v1094
    %v1096 = vpop.f32.mrb[0].mxu0
    %1097 = vdwg.mxu0
    %v1098 = vadd.f32 %v935, %v1095
    %v1099 = vtanh.pop %v1098
    %v1100 = vmul.f32 %v1099, %v1016
    %v1101 = vsub.f32 1.0, %v1016
    %v1102 = vmul.f32 %v642, %v1101
    %v1103 = vadd.f32 %v1100, %v1102
    %1104 = vst.msk [vmem:[#allocation14 + $0x8] sm:$0xff] %vm165, %v1103
    // Predicated region
    $region62: #{tpu_custom_call.1} parent=1 // pred_check
      _
    $region63: #{tpu_custom_call.1} parent=1 // pred_check_branch
      %1106 = sbr.rel (0) target = $region65
    $region64: #{tpu_custom_call.1} parent=1 // pred_region
      %s1108 = ssub.s32 256, 256
      %1109 = vsyncadd [#allocation4], %s1108
      %s1110 = sshll.u32 [#allocation14], 4
      %s1111 = int_to_ptr.vmem [resolvable:$true] %s1110
      %1116 = dma.vmem_to_hbm [thread:$0]  %s1111, 256, %s8, [#allocation4], 128, 128, 8
    $region65: #{tpu_custom_call.1} parent=1 // pred_fallthru
      _
    // Predicated region
    $region66: #{tpu_custom_call.1} parent=1 // pred_check
      _
    $region67: #{tpu_custom_call.1} parent=1 // pred_check_branch
      %1118 = sbr.rel (0) target = $region69
    $region68: #{tpu_custom_call.1} parent=1 // pred_region
      %1119 = dma.done [#allocation4], 256
    $region69: #{tpu_custom_call.1} parent=1 // pred_fallthru
      _
    %1120 = vsyncpa [#allocation3], 1
    %1121 = vsyncpa [#allocation6], 1
    %1122 = vsyncpa [#allocation9], 1
    %1123 = vsyncpa [#allocation12], 1
    %1124 = vsyncpa [#allocation4], 1

</llo_original>
